<compile_context>
chip_gen: v7x
topology: tpu7x:2x2x1
jax: 0.10.0
libtpu: 0.0.40
codegen_flags: <defaults>
</compile_context>

<pallas_src>
import math
from functools import partial

import jax
import jax.numpy as jnp
from jax.experimental import pallas as pl
from jax.experimental.pallas import tpu as pltpu

_LANE = 128
_SUBLANE = 8
_INT32_MIN = -2147483648
_EXP_MASK = 0x7FFFFFFF


def _round_up(n, m):
    return ((n + m - 1) // m) * m


# --------------------------------------------------------------------------
# Kernels
# --------------------------------------------------------------------------
def _kwta_sparsity_kernel(x_ref, o_ref, *, k_active, hardness, hard, training):
    """Row-batched kWTA-soft with exact rank selection via radix select.

    x_ref / o_ref: (TB, Dp) f32, Dp a multiple of 128; padding columns = -inf.
    """
    x = x_ref[...]                                           # (TB, Dp) f32

    # Order-preserving map f32 -> signed int32 key: key(a) < key(b) <=> a < b.
    bits = pltpu.bitcast(x, jnp.int32)
    skey = jnp.where(bits < 0, bits ^ jnp.int32(_EXP_MASK), bits)

    # Radix select, MSB -> LSB: cand converges to the key of the k-th largest
    # element per row, i.e. the largest t with count(key >= t) >= k.
    # Sign bit handled first, then 31 uniform bit trials.
    c_pos = jnp.sum((skey >= 0).astype(jnp.int32), axis=-1, keepdims=True)
    cand = jnp.where(c_pos >= k_active, jnp.int32(0), jnp.int32(_INT32_MIN))
    for b in range(30, -1, -1):
        trial = cand | jnp.int32(1 << b)
        cnt = jnp.sum((skey >= trial).astype(jnp.int32), axis=-1, keepdims=True)
        cand = jnp.where(cnt >= k_active, trial, cand)

    # k-th largest value = min over elements whose key >= cand.
    vk = jnp.min(jnp.where(skey >= cand, x, jnp.inf), axis=-1, keepdims=True)
    # (k+1)-th largest: tie with vk, or the max element strictly below it.
    c_ge = jnp.sum((skey >= cand).astype(jnp.int32), axis=-1, keepdims=True)
    below = jnp.max(jnp.where(skey < cand, x, -jnp.inf), axis=-1, keepdims=True)
    vk1 = jnp.where(c_ge >= k_active + 1, vk, below)

    thr = 0.5 * (vk + vk1)                                   # (TB, 1)

    if training:
        if hard:
            a = jnp.float32(hardness / 6.0)   # fold hardness/6 at trace time
            o_ref[...] = jnp.clip(a * (x - thr) + 0.5, 0.0, 1.0)
        else:
            o_ref[...] = jax.nn.sigmoid(jnp.float32(hardness) * (x - thr))
    else:
        o_ref[...] = (x > thr).astype(jnp.float32)


def _kwta_fixed_threshold_kernel(x_ref, t_ref, o_ref, *, hardness, hard, training):
    """threshold_size mode: fixed per-feature threshold (pure elementwise)."""
    x = x_ref[...]                            # (TB, Dp)
    thr = t_ref[...]                          # (1, Dp), broadcasts over rows
    if training:
        if hard:
            a = jnp.float32(hardness / 6.0)
            o_ref[...] = jnp.clip(a * (x - thr) + 0.5, 0.0, 1.0)
        else:
            o_ref[...] = jax.nn.sigmoid(jnp.float32(hardness) * (x - thr))
    else:
        o_ref[...] = (x > thr).astype(jnp.float32)


# --------------------------------------------------------------------------
# Wrappers
# --------------------------------------------------------------------------
def kwta_soft_sparsity(x, sparsity, hardness=1.0, hard=True, training=True):
    orig_shape = x.shape
    B = orig_shape[0]
    D = math.prod(orig_shape[1:])
    if D < 2:
        raise ValueError(f"Embedding dimension {D} should be >= 2")
    k_active = math.ceil(sparsity * D)
    if k_active >= D:              # module warning path: keep 1 element at zero
        k_active = D - 1
    if k_active < 1:
        raise ValueError(f"sparsity {sparsity} selects zero winners")

    TB = _SUBLANE                  # 8 rows per grid step fills vreg sublanes
    Dp = _round_up(D, _LANE)       # lane-dense, unmasked output stores
    Bp = _round_up(B, TB)

    xf = x.reshape(B, D).astype(jnp.float32)
    if Dp != D:                    # -inf pads never win and keep ranks exact
        xf = jnp.pad(xf, ((0, 0), (0, Dp - D)), constant_values=-jnp.inf)
    if Bp != B:
        xf = jnp.pad(xf, ((0, Bp - B), (0, 0)))

    kernel = partial(_kwta_sparsity_kernel, k_active=k_active,
                     hardness=float(hardness), hard=hard, training=training)

    out = pl.pallas_call(
        kernel,
        out_shape=jax.ShapeDtypeStruct((Bp, Dp), jnp.float32),
        grid_spec=pltpu.PrefetchScalarGridSpec(
            num_scalar_prefetch=0,
            grid=(Bp // TB,),
            in_specs=[pl.BlockSpec((TB, Dp), lambda i: (i, 0))],
            out_specs=pl.BlockSpec((TB, Dp), lambda i: (i, 0)),
        ),
        compiler_params=pltpu.CompilerParams(
            dimension_semantics=("parallel",)),
    )(xf)

    out = out[:B, :D].reshape(orig_shape)
    return out.astype(x.dtype) if training else out


def kwta_soft_fixed_threshold(x, threshold_weight, hardness=1.0, hard=True,
                              training=True):
    """threshold_weight: (1, D) with D == numel(x)//x.shape[0] (nn.Linear.weight)."""
    orig_shape = x.shape
    B = orig_shape[0]
    D = math.prod(orig_shape[1:])
    assert threshold_weight.size == D

    Dp = _round_up(D, _LANE)
    TB = _SUBLANE if B <= 64 else 64          # larger lane-dense blocks for big B
    Bp = _round_up(B, TB)

    xf = x.reshape(B, D).astype(jnp.float32)
    xf = jnp.pad(xf, ((0, Bp - B), (0, Dp - D)))
    t = jnp.pad(threshold_weight.reshape(1, D).astype(jnp.float32),
                ((0, 0), (0, Dp - D)))

    kernel = partial(_kwta_fixed_threshold_kernel, hardness=float(hardness),
                     hard=hard, training=training)

    out = pl.pallas_call(
        kernel,
        out_shape=jax.ShapeDtypeStruct((Bp, Dp), jnp.float32),
        grid_spec=pltpu.PrefetchScalarGridSpec(
            num_scalar_prefetch=0,
            grid=(Bp // TB,),
            in_specs=[pl.BlockSpec((TB, Dp), lambda i: (i, 0)),
                      pl.BlockSpec((1, Dp), lambda i: (0, 0))],  # VMEM-resident
            out_specs=pl.BlockSpec((TB, Dp), lambda i: (i, 0)),
        ),
        compiler_params=pltpu.CompilerParams(
            dimension_semantics=("parallel",)),
    )(xf, t)

    out = out[:B, :D].reshape(orig_shape)
    return out.astype(x.dtype) if training else out


# --------------------------------------------------------------------------
# Pure-JAX references (mirror the PyTorch forward)
# --------------------------------------------------------------------------
def _ref_kwta_soft_sparsity(x, sparsity, hardness=1.0, hard=True, training=True):
    B = x.shape[0]
    xf = x.reshape(B, -1)
    D = xf.shape[1]
    k = math.ceil(sparsity * D)
    if k == D:
        k -= 1
    vals = jax.lax.top_k(xf, k + 1)[0]                 # descending
    thr = (vals[:, k - 1] + vals[:, k]) * 0.5
    thr = thr.reshape((B,) + (1,) * (x.ndim - 1))
    if training:
        y = hardness * (x - thr)
        return jnp.clip(y / 6.0 + 0.5, 0.0, 1.0) if hard else jax.nn.sigmoid(y)
    return (x > thr).astype(jnp.float32)


def _ref_kwta_soft_fixed_threshold(x, w, hardness=1.0, hard=True, training=True):
    thr = w.reshape((1,) + x.shape[1:])
    if training:
        y = hardness * (x - thr)
        return jnp.clip(y / 6.0 + 0.5, 0.0, 1.0) if hard else jax.nn.sigmoid(y)
    return (x > thr).astype(jnp.float32)


# TODO(synk): SparsityPredictor ('auto' learned sparsity via Normal.icdf) and the
# straight-through autograd backward are not covered (forward kernels only).

# --------------------------------------------------------------------------
if __name__ == "__main__":
    key = jax.random.PRNGKey(0)
    kx, kw, kx2 = jax.random.split(key, 3)

    B, C, H, W = 2, 4, 16, 16            # NCHW conv-style input
    D = C * H * W                        # 1024
    x = jax.random.normal(kx, (B, C, H, W), dtype=jnp.float32)

    sparsity = 0.25
    hardness = 2.0

    # --- sparsity mode, training (hardsigmoid) ---
    out_tr = kwta_soft_sparsity(x, sparsity, hardness=hardness,
                                hard=True, training=True)
    jax.block_until_ready(out_tr)
    ref_tr = _ref_kwta_soft_sparsity(x, sparsity, hardness=hardness,
                                     hard=True, training=True)
    assert out_tr.shape == x.shape
    assert jnp.allclose(out_tr, ref_tr, atol=1e-5), "training-mode mismatch"

    # --- sparsity mode, training (soft sigmoid) ---
    out_sg = kwta_soft_sparsity(x, sparsity, hardness=hardness,
                                hard=False, training=True)
    ref_sg = _ref_kwta_soft_sparsity(x, sparsity, hardness=hardness,
                                     hard=False, training=True)
    assert jnp.allclose(out_sg, ref_sg, atol=1e-5), "sigmoid-mode mismatch"

    # --- sparsity mode, eval (binary mask) ---
    out_ev = kwta_soft_sparsity(x, sparsity, hardness=hardness,
                                hard=True, training=False)
    jax.block_until_ready(out_ev)
    ref_ev = _ref_kwta_soft_sparsity(x, sparsity, training=False)
    assert jnp.array_equal(out_ev, ref_ev), "eval-mode mismatch"
    assert jnp.all(out_ev.reshape(B, -1).sum(axis=1)
                   == math.ceil(sparsity * D)), "wrong number of winners"

    # --- sparsity mode, non-128-aligned flattened dim (padding path) ---
    x2 = jax.random.normal(kx2, (3, 300), dtype=jnp.float32)
    out2 = kwta_soft_sparsity(x2, 0.1, hardness=hardness, hard=True, training=True)
    ref2 = _ref_kwta_soft_sparsity(x2, 0.1, hardness=hardness, hard=True,
                                   training=True)
    assert jnp.allclose(out2, ref2, atol=1e-5), "padded-D mismatch"

    # --- threshold_size mode (nn.Linear(D, 1, bias=False).weight init) ---
    bound = 1.0 / math.sqrt(D)
    w_thr = jax.random.uniform(kw, (1, D), dtype=jnp.float32,
                               minval=-bound, maxval=bound)
    out_th = kwta_soft_fixed_threshold(x, w_thr, hardness=hardness,
                                       hard=True, training=True)
    jax.block_until_ready(out_th)
    ref_th = _ref_kwta_soft_fixed_threshold(x, w_thr, hardness=hardness,
                                            hard=True, training=True)
    assert jnp.allclose(out_th, ref_th, atol=1e-5), "threshold-mode mismatch"

    print("KERNEL_OK")
</pallas_src>

<mosaic_0001>
module attributes {stable_mosaic.version = 11 : i64} {
  func.func @_kwta_sparsity_kernel(%arg0: i32, %arg1: memref<8x1024xf32, #tpu.memory_space<vmem>>, %arg2: memref<8x1024xf32, #tpu.memory_space<vmem>>) attributes {dimension_semantics = [#tpu.dimension_semantics<parallel>], iteration_bounds = array<i64: 1>, scalar_prefetch = 0 : i64, scratch_operands = 0 : i64, tpu.core_type = #tpu.core_type<tc>, window_params = [{transform_indices = @transform_0, window_bounds = array<i64: 8, 1024>}, {transform_indices = @transform_1, window_bounds = array<i64: 8, 1024>}]} {
    %c0 = arith.constant 0 : index
    %c0_0 = arith.constant 0 : index
    %0 = vector.load %arg1[%c0, %c0_0] : memref<8x1024xf32, #tpu.memory_space<vmem>>, vector<8x1024xf32>
    %1 = tpu.bitcast %0 : vector<8x1024xf32> -> vector<8x1024xi32>
    %c0_i32 = arith.constant 0 : i32
    %2 = vector.broadcast %c0_i32 : i32 to vector<8x1024xi32>
    %3 = arith.cmpi slt, %1, %2 : vector<8x1024xi32>
    %c2147483647_i32 = arith.constant 2147483647 : i32
    %4 = vector.broadcast %c2147483647_i32 : i32 to vector<8x1024xi32>
    %5 = arith.xori %1, %4 : vector<8x1024xi32>
    %6 = arith.select %3, %5, %1 : vector<8x1024xi1>, vector<8x1024xi32>
    %c0_i32_1 = arith.constant 0 : i32
    %7 = vector.broadcast %c0_i32_1 : i32 to vector<8x1024xi32>
    %8 = arith.cmpi sge, %6, %7 : vector<8x1024xi32>
    %9 = arith.extui %8 : vector<8x1024xi1> to vector<8x1024xi32>
    %cst = arith.constant dense<0> : vector<8xi32>
    %10 = vector.multi_reduction <add>, %9, %cst [1] : vector<8x1024xi32> to vector<8xi32>
    %11 = vector.shape_cast %10 : vector<8xi32> to vector<8x1xi32>
    %c256_i32 = arith.constant 256 : i32
    %12 = vector.broadcast %c256_i32 : i32 to vector<8x1xi32>
    %13 = arith.cmpi sge, %11, %12 : vector<8x1xi32>
    %c0_i32_2 = arith.constant 0 : i32
    %c-2147483648_i32 = arith.constant -2147483648 : i32
    %14 = vector.broadcast %c0_i32_2 : i32 to vector<8x1xi32>
    %15 = vector.broadcast %c-2147483648_i32 : i32 to vector<8x1xi32>
    %16 = arith.select %13, %14, %15 : vector<8x1xi1>, vector<8x1xi32>
    %c1073741824_i32 = arith.constant 1073741824 : i32
    %17 = vector.broadcast %c1073741824_i32 : i32 to vector<8x1xi32>
    %18 = arith.ori %16, %17 : vector<8x1xi32>
    %19 = vector.broadcast %18 : vector<8x1xi32> to vector<8x1024xi32>
    %20 = arith.cmpi sge, %6, %19 : vector<8x1024xi32>
    %21 = arith.extui %20 : vector<8x1024xi1> to vector<8x1024xi32>
    %cst_3 = arith.constant dense<0> : vector<8xi32>
    %22 = vector.multi_reduction <add>, %21, %cst_3 [1] : vector<8x1024xi32> to vector<8xi32>
    %23 = vector.shape_cast %22 : vector<8xi32> to vector<8x1xi32>
    %c256_i32_4 = arith.constant 256 : i32
    %24 = vector.broadcast %c256_i32_4 : i32 to vector<8x1xi32>
    %25 = arith.cmpi sge, %23, %24 : vector<8x1xi32>
    %26 = arith.select %25, %18, %16 : vector<8x1xi1>, vector<8x1xi32>
    %c536870912_i32 = arith.constant 536870912 : i32
    %27 = vector.broadcast %c536870912_i32 : i32 to vector<8x1xi32>
    %28 = arith.ori %26, %27 : vector<8x1xi32>
    %29 = vector.broadcast %28 : vector<8x1xi32> to vector<8x1024xi32>
    %30 = arith.cmpi sge, %6, %29 : vector<8x1024xi32>
    %31 = arith.extui %30 : vector<8x1024xi1> to vector<8x1024xi32>
    %cst_5 = arith.constant dense<0> : vector<8xi32>
    %32 = vector.multi_reduction <add>, %31, %cst_5 [1] : vector<8x1024xi32> to vector<8xi32>
    %33 = vector.shape_cast %32 : vector<8xi32> to vector<8x1xi32>
    %c256_i32_6 = arith.constant 256 : i32
    %34 = vector.broadcast %c256_i32_6 : i32 to vector<8x1xi32>
    %35 = arith.cmpi sge, %33, %34 : vector<8x1xi32>
    %36 = arith.select %35, %28, %26 : vector<8x1xi1>, vector<8x1xi32>
    %c268435456_i32 = arith.constant 268435456 : i32
    %37 = vector.broadcast %c268435456_i32 : i32 to vector<8x1xi32>
    %38 = arith.ori %36, %37 : vector<8x1xi32>
    %39 = vector.broadcast %38 : vector<8x1xi32> to vector<8x1024xi32>
    %40 = arith.cmpi sge, %6, %39 : vector<8x1024xi32>
    %41 = arith.extui %40 : vector<8x1024xi1> to vector<8x1024xi32>
    %cst_7 = arith.constant dense<0> : vector<8xi32>
    %42 = vector.multi_reduction <add>, %41, %cst_7 [1] : vector<8x1024xi32> to vector<8xi32>
    %43 = vector.shape_cast %42 : vector<8xi32> to vector<8x1xi32>
    %c256_i32_8 = arith.constant 256 : i32
    %44 = vector.broadcast %c256_i32_8 : i32 to vector<8x1xi32>
    %45 = arith.cmpi sge, %43, %44 : vector<8x1xi32>
    %46 = arith.select %45, %38, %36 : vector<8x1xi1>, vector<8x1xi32>
    %c134217728_i32 = arith.constant 134217728 : i32
    %47 = vector.broadcast %c134217728_i32 : i32 to vector<8x1xi32>
    %48 = arith.ori %46, %47 : vector<8x1xi32>
    %49 = vector.broadcast %48 : vector<8x1xi32> to vector<8x1024xi32>
    %50 = arith.cmpi sge, %6, %49 : vector<8x1024xi32>
    %51 = arith.extui %50 : vector<8x1024xi1> to vector<8x1024xi32>
    %cst_9 = arith.constant dense<0> : vector<8xi32>
    %52 = vector.multi_reduction <add>, %51, %cst_9 [1] : vector<8x1024xi32> to vector<8xi32>
    %53 = vector.shape_cast %52 : vector<8xi32> to vector<8x1xi32>
    %c256_i32_10 = arith.constant 256 : i32
    %54 = vector.broadcast %c256_i32_10 : i32 to vector<8x1xi32>
    %55 = arith.cmpi sge, %53, %54 : vector<8x1xi32>
    %56 = arith.select %55, %48, %46 : vector<8x1xi1>, vector<8x1xi32>
    %c67108864_i32 = arith.constant 67108864 : i32
    %57 = vector.broadcast %c67108864_i32 : i32 to vector<8x1xi32>
    %58 = arith.ori %56, %57 : vector<8x1xi32>
    %59 = vector.broadcast %58 : vector<8x1xi32> to vector<8x1024xi32>
    %60 = arith.cmpi sge, %6, %59 : vector<8x1024xi32>
    %61 = arith.extui %60 : vector<8x1024xi1> to vector<8x1024xi32>
    %cst_11 = arith.constant dense<0> : vector<8xi32>
    %62 = vector.multi_reduction <add>, %61, %cst_11 [1] : vector<8x1024xi32> to vector<8xi32>
    %63 = vector.shape_cast %62 : vector<8xi32> to vector<8x1xi32>
    %c256_i32_12 = arith.constant 256 : i32
    %64 = vector.broadcast %c256_i32_12 : i32 to vector<8x1xi32>
    %65 = arith.cmpi sge, %63, %64 : vector<8x1xi32>
    %66 = arith.select %65, %58, %56 : vector<8x1xi1>, vector<8x1xi32>
    %c33554432_i32 = arith.constant 33554432 : i32
    %67 = vector.broadcast %c33554432_i32 : i32 to vector<8x1xi32>
    %68 = arith.ori %66, %67 : vector<8x1xi32>
    %69 = vector.broadcast %68 : vector<8x1xi32> to vector<8x1024xi32>
    %70 = arith.cmpi sge, %6, %69 : vector<8x1024xi32>
    %71 = arith.extui %70 : vector<8x1024xi1> to vector<8x1024xi32>
    %cst_13 = arith.constant dense<0> : vector<8xi32>
    %72 = vector.multi_reduction <add>, %71, %cst_13 [1] : vector<8x1024xi32> to vector<8xi32>
    %73 = vector.shape_cast %72 : vector<8xi32> to vector<8x1xi32>
    %c256_i32_14 = arith.constant 256 : i32
    %74 = vector.broadcast %c256_i32_14 : i32 to vector<8x1xi32>
    %75 = arith.cmpi sge, %73, %74 : vector<8x1xi32>
    %76 = arith.select %75, %68, %66 : vector<8x1xi1>, vector<8x1xi32>
    %c16777216_i32 = arith.constant 16777216 : i32
    %77 = vector.broadcast %c16777216_i32 : i32 to vector<8x1xi32>
    %78 = arith.ori %76, %77 : vector<8x1xi32>
    %79 = vector.broadcast %78 : vector<8x1xi32> to vector<8x1024xi32>
    %80 = arith.cmpi sge, %6, %79 : vector<8x1024xi32>
    %81 = arith.extui %80 : vector<8x1024xi1> to vector<8x1024xi32>
    %cst_15 = arith.constant dense<0> : vector<8xi32>
    %82 = vector.multi_reduction <add>, %81, %cst_15 [1] : vector<8x1024xi32> to vector<8xi32>
    %83 = vector.shape_cast %82 : vector<8xi32> to vector<8x1xi32>
    %c256_i32_16 = arith.constant 256 : i32
    %84 = vector.broadcast %c256_i32_16 : i32 to vector<8x1xi32>
    %85 = arith.cmpi sge, %83, %84 : vector<8x1xi32>
    %86 = arith.select %85, %78, %76 : vector<8x1xi1>, vector<8x1xi32>
    %c8388608_i32 = arith.constant 8388608 : i32
    %87 = vector.broadcast %c8388608_i32 : i32 to vector<8x1xi32>
    %88 = arith.ori %86, %87 : vector<8x1xi32>
    %89 = vector.broadcast %88 : vector<8x1xi32> to vector<8x1024xi32>
    %90 = arith.cmpi sge, %6, %89 : vector<8x1024xi32>
    %91 = arith.extui %90 : vector<8x1024xi1> to vector<8x1024xi32>
    %cst_17 = arith.constant dense<0> : vector<8xi32>
    %92 = vector.multi_reduction <add>, %91, %cst_17 [1] : vector<8x1024xi32> to vector<8xi32>
    %93 = vector.shape_cast %92 : vector<8xi32> to vector<8x1xi32>
    %c256_i32_18 = arith.constant 256 : i32
    %94 = vector.broadcast %c256_i32_18 : i32 to vector<8x1xi32>
    %95 = arith.cmpi sge, %93, %94 : vector<8x1xi32>
    %96 = arith.select %95, %88, %86 : vector<8x1xi1>, vector<8x1xi32>
    %c4194304_i32 = arith.constant 4194304 : i32
    %97 = vector.broadcast %c4194304_i32 : i32 to vector<8x1xi32>
    %98 = arith.ori %96, %97 : vector<8x1xi32>
    %99 = vector.broadcast %98 : vector<8x1xi32> to vector<8x1024xi32>
    %100 = arith.cmpi sge, %6, %99 : vector<8x1024xi32>
    %101 = arith.extui %100 : vector<8x1024xi1> to vector<8x1024xi32>
    %cst_19 = arith.constant dense<0> : vector<8xi32>
    %102 = vector.multi_reduction <add>, %101, %cst_19 [1] : vector<8x1024xi32> to vector<8xi32>
    %103 = vector.shape_cast %102 : vector<8xi32> to vector<8x1xi32>
    %c256_i32_20 = arith.constant 256 : i32
    %104 = vector.broadcast %c256_i32_20 : i32 to vector<8x1xi32>
    %105 = arith.cmpi sge, %103, %104 : vector<8x1xi32>
    %106 = arith.select %105, %98, %96 : vector<8x1xi1>, vector<8x1xi32>
    %c2097152_i32 = arith.constant 2097152 : i32
    %107 = vector.broadcast %c2097152_i32 : i32 to vector<8x1xi32>
    %108 = arith.ori %106, %107 : vector<8x1xi32>
    %109 = vector.broadcast %108 : vector<8x1xi32> to vector<8x1024xi32>
    %110 = arith.cmpi sge, %6, %109 : vector<8x1024xi32>
    %111 = arith.extui %110 : vector<8x1024xi1> to vector<8x1024xi32>
    %cst_21 = arith.constant dense<0> : vector<8xi32>
    %112 = vector.multi_reduction <add>, %111, %cst_21 [1] : vector<8x1024xi32> to vector<8xi32>
    %113 = vector.shape_cast %112 : vector<8xi32> to vector<8x1xi32>
    %c256_i32_22 = arith.constant 256 : i32
    %114 = vector.broadcast %c256_i32_22 : i32 to vector<8x1xi32>
    %115 = arith.cmpi sge, %113, %114 : vector<8x1xi32>
    %116 = arith.select %115, %108, %106 : vector<8x1xi1>, vector<8x1xi32>
    %c1048576_i32 = arith.constant 1048576 : i32
    %117 = vector.broadcast %c1048576_i32 : i32 to vector<8x1xi32>
    %118 = arith.ori %116, %117 : vector<8x1xi32>
    %119 = vector.broadcast %118 : vector<8x1xi32> to vector<8x1024xi32>
    %120 = arith.cmpi sge, %6, %119 : vector<8x1024xi32>
    %121 = arith.extui %120 : vector<8x1024xi1> to vector<8x1024xi32>
    %cst_23 = arith.constant dense<0> : vector<8xi32>
    %122 = vector.multi_reduction <add>, %121, %cst_23 [1] : vector<8x1024xi32> to vector<8xi32>
    %123 = vector.shape_cast %122 : vector<8xi32> to vector<8x1xi32>
    %c256_i32_24 = arith.constant 256 : i32
    %124 = vector.broadcast %c256_i32_24 : i32 to vector<8x1xi32>
    %125 = arith.cmpi sge, %123, %124 : vector<8x1xi32>
    %126 = arith.select %125, %118, %116 : vector<8x1xi1>, vector<8x1xi32>
    %c524288_i32 = arith.constant 524288 : i32
    %127 = vector.broadcast %c524288_i32 : i32 to vector<8x1xi32>
    %128 = arith.ori %126, %127 : vector<8x1xi32>
    %129 = vector.broadcast %128 : vector<8x1xi32> to vector<8x1024xi32>
    %130 = arith.cmpi sge, %6, %129 : vector<8x1024xi32>
    %131 = arith.extui %130 : vector<8x1024xi1> to vector<8x1024xi32>
    %cst_25 = arith.constant dense<0> : vector<8xi32>
    %132 = vector.multi_reduction <add>, %131, %cst_25 [1] : vector<8x1024xi32> to vector<8xi32>
    %133 = vector.shape_cast %132 : vector<8xi32> to vector<8x1xi32>
    %c256_i32_26 = arith.constant 256 : i32
    %134 = vector.broadcast %c256_i32_26 : i32 to vector<8x1xi32>
    %135 = arith.cmpi sge, %133, %134 : vector<8x1xi32>
    %136 = arith.select %135, %128, %126 : vector<8x1xi1>, vector<8x1xi32>
    %c262144_i32 = arith.constant 262144 : i32
    %137 = vector.broadcast %c262144_i32 : i32 to vector<8x1xi32>
    %138 = arith.ori %136, %137 : vector<8x1xi32>
    %139 = vector.broadcast %138 : vector<8x1xi32> to vector<8x1024xi32>
    %140 = arith.cmpi sge, %6, %139 : vector<8x1024xi32>
    %141 = arith.extui %140 : vector<8x1024xi1> to vector<8x1024xi32>
    %cst_27 = arith.constant dense<0> : vector<8xi32>
    %142 = vector.multi_reduction <add>, %141, %cst_27 [1] : vector<8x1024xi32> to vector<8xi32>
    %143 = vector.shape_cast %142 : vector<8xi32> to vector<8x1xi32>
    %c256_i32_28 = arith.constant 256 : i32
    %144 = vector.broadcast %c256_i32_28 : i32 to vector<8x1xi32>
    %145 = arith.cmpi sge, %143, %144 : vector<8x1xi32>
    %146 = arith.select %145, %138, %136 : vector<8x1xi1>, vector<8x1xi32>
    %c131072_i32 = arith.constant 131072 : i32
    %147 = vector.broadcast %c131072_i32 : i32 to vector<8x1xi32>
    %148 = arith.ori %146, %147 : vector<8x1xi32>
    %149 = vector.broadcast %148 : vector<8x1xi32> to vector<8x1024xi32>
    %150 = arith.cmpi sge, %6, %149 : vector<8x1024xi32>
    %151 = arith.extui %150 : vector<8x1024xi1> to vector<8x1024xi32>
    %cst_29 = arith.constant dense<0> : vector<8xi32>
    %152 = vector.multi_reduction <add>, %151, %cst_29 [1] : vector<8x1024xi32> to vector<8xi32>
    %153 = vector.shape_cast %152 : vector<8xi32> to vector<8x1xi32>
    %c256_i32_30 = arith.constant 256 : i32
    %154 = vector.broadcast %c256_i32_30 : i32 to vector<8x1xi32>
    %155 = arith.cmpi sge, %153, %154 : vector<8x1xi32>
    %156 = arith.select %155, %148, %146 : vector<8x1xi1>, vector<8x1xi32>
    %c65536_i32 = arith.constant 65536 : i32
    %157 = vector.broadcast %c65536_i32 : i32 to vector<8x1xi32>
    %158 = arith.ori %156, %157 : vector<8x1xi32>
    %159 = vector.broadcast %158 : vector<8x1xi32> to vector<8x1024xi32>
    %160 = arith.cmpi sge, %6, %159 : vector<8x1024xi32>
    %161 = arith.extui %160 : vector<8x1024xi1> to vector<8x1024xi32>
    %cst_31 = arith.constant dense<0> : vector<8xi32>
    %162 = vector.multi_reduction <add>, %161, %cst_31 [1] : vector<8x1024xi32> to vector<8xi32>
    %163 = vector.shape_cast %162 : vector<8xi32> to vector<8x1xi32>
    %c256_i32_32 = arith.constant 256 : i32
    %164 = vector.broadcast %c256_i32_32 : i32 to vector<8x1xi32>
    %165 = arith.cmpi sge, %163, %164 : vector<8x1xi32>
    %166 = arith.select %165, %158, %156 : vector<8x1xi1>, vector<8x1xi32>
    %c32768_i32 = arith.constant 32768 : i32
    %167 = vector.broadcast %c32768_i32 : i32 to vector<8x1xi32>
    %168 = arith.ori %166, %167 : vector<8x1xi32>
    %169 = vector.broadcast %168 : vector<8x1xi32> to vector<8x1024xi32>
    %170 = arith.cmpi sge, %6, %169 : vector<8x1024xi32>
    %171 = arith.extui %170 : vector<8x1024xi1> to vector<8x1024xi32>
    %cst_33 = arith.constant dense<0> : vector<8xi32>
    %172 = vector.multi_reduction <add>, %171, %cst_33 [1] : vector<8x1024xi32> to vector<8xi32>
    %173 = vector.shape_cast %172 : vector<8xi32> to vector<8x1xi32>
    %c256_i32_34 = arith.constant 256 : i32
    %174 = vector.broadcast %c256_i32_34 : i32 to vector<8x1xi32>
    %175 = arith.cmpi sge, %173, %174 : vector<8x1xi32>
    %176 = arith.select %175, %168, %166 : vector<8x1xi1>, vector<8x1xi32>
    %c16384_i32 = arith.constant 16384 : i32
    %177 = vector.broadcast %c16384_i32 : i32 to vector<8x1xi32>
    %178 = arith.ori %176, %177 : vector<8x1xi32>
    %179 = vector.broadcast %178 : vector<8x1xi32> to vector<8x1024xi32>
    %180 = arith.cmpi sge, %6, %179 : vector<8x1024xi32>
    %181 = arith.extui %180 : vector<8x1024xi1> to vector<8x1024xi32>
    %cst_35 = arith.constant dense<0> : vector<8xi32>
    %182 = vector.multi_reduction <add>, %181, %cst_35 [1] : vector<8x1024xi32> to vector<8xi32>
    %183 = vector.shape_cast %182 : vector<8xi32> to vector<8x1xi32>
    %c256_i32_36 = arith.constant 256 : i32
    %184 = vector.broadcast %c256_i32_36 : i32 to vector<8x1xi32>
    %185 = arith.cmpi sge, %183, %184 : vector<8x1xi32>
    %186 = arith.select %185, %178, %176 : vector<8x1xi1>, vector<8x1xi32>
    %c8192_i32 = arith.constant 8192 : i32
    %187 = vector.broadcast %c8192_i32 : i32 to vector<8x1xi32>
    %188 = arith.ori %186, %187 : vector<8x1xi32>
    %189 = vector.broadcast %188 : vector<8x1xi32> to vector<8x1024xi32>
    %190 = arith.cmpi sge, %6, %189 : vector<8x1024xi32>
    %191 = arith.extui %190 : vector<8x1024xi1> to vector<8x1024xi32>
    %cst_37 = arith.constant dense<0> : vector<8xi32>
    %192 = vector.multi_reduction <add>, %191, %cst_37 [1] : vector<8x1024xi32> to vector<8xi32>
    %193 = vector.shape_cast %192 : vector<8xi32> to vector<8x1xi32>
    %c256_i32_38 = arith.constant 256 : i32
    %194 = vector.broadcast %c256_i32_38 : i32 to vector<8x1xi32>
    %195 = arith.cmpi sge, %193, %194 : vector<8x1xi32>
    %196 = arith.select %195, %188, %186 : vector<8x1xi1>, vector<8x1xi32>
    %c4096_i32 = arith.constant 4096 : i32
    %197 = vector.broadcast %c4096_i32 : i32 to vector<8x1xi32>
    %198 = arith.ori %196, %197 : vector<8x1xi32>
    %199 = vector.broadcast %198 : vector<8x1xi32> to vector<8x1024xi32>
    %200 = arith.cmpi sge, %6, %199 : vector<8x1024xi32>
    %201 = arith.extui %200 : vector<8x1024xi1> to vector<8x1024xi32>
    %cst_39 = arith.constant dense<0> : vector<8xi32>
    %202 = vector.multi_reduction <add>, %201, %cst_39 [1] : vector<8x1024xi32> to vector<8xi32>
    %203 = vector.shape_cast %202 : vector<8xi32> to vector<8x1xi32>
    %c256_i32_40 = arith.constant 256 : i32
    %204 = vector.broadcast %c256_i32_40 : i32 to vector<8x1xi32>
    %205 = arith.cmpi sge, %203, %204 : vector<8x1xi32>
    %206 = arith.select %205, %198, %196 : vector<8x1xi1>, vector<8x1xi32>
    %c2048_i32 = arith.constant 2048 : i32
    %207 = vector.broadcast %c2048_i32 : i32 to vector<8x1xi32>
    %208 = arith.ori %206, %207 : vector<8x1xi32>
    %209 = vector.broadcast %208 : vector<8x1xi32> to vector<8x1024xi32>
    %210 = arith.cmpi sge, %6, %209 : vector<8x1024xi32>
    %211 = arith.extui %210 : vector<8x1024xi1> to vector<8x1024xi32>
    %cst_41 = arith.constant dense<0> : vector<8xi32>
    %212 = vector.multi_reduction <add>, %211, %cst_41 [1] : vector<8x1024xi32> to vector<8xi32>
    %213 = vector.shape_cast %212 : vector<8xi32> to vector<8x1xi32>
    %c256_i32_42 = arith.constant 256 : i32
    %214 = vector.broadcast %c256_i32_42 : i32 to vector<8x1xi32>
    %215 = arith.cmpi sge, %213, %214 : vector<8x1xi32>
    %216 = arith.select %215, %208, %206 : vector<8x1xi1>, vector<8x1xi32>
    %c1024_i32 = arith.constant 1024 : i32
    %217 = vector.broadcast %c1024_i32 : i32 to vector<8x1xi32>
    %218 = arith.ori %216, %217 : vector<8x1xi32>
    %219 = vector.broadcast %218 : vector<8x1xi32> to vector<8x1024xi32>
    %220 = arith.cmpi sge, %6, %219 : vector<8x1024xi32>
    %221 = arith.extui %220 : vector<8x1024xi1> to vector<8x1024xi32>
    %cst_43 = arith.constant dense<0> : vector<8xi32>
    %222 = vector.multi_reduction <add>, %221, %cst_43 [1] : vector<8x1024xi32> to vector<8xi32>
    %223 = vector.shape_cast %222 : vector<8xi32> to vector<8x1xi32>
    %c256_i32_44 = arith.constant 256 : i32
    %224 = vector.broadcast %c256_i32_44 : i32 to vector<8x1xi32>
    %225 = arith.cmpi sge, %223, %224 : vector<8x1xi32>
    %226 = arith.select %225, %218, %216 : vector<8x1xi1>, vector<8x1xi32>
    %c512_i32 = arith.constant 512 : i32
    %227 = vector.broadcast %c512_i32 : i32 to vector<8x1xi32>
    %228 = arith.ori %226, %227 : vector<8x1xi32>
    %229 = vector.broadcast %228 : vector<8x1xi32> to vector<8x1024xi32>
    %230 = arith.cmpi sge, %6, %229 : vector<8x1024xi32>
    %231 = arith.extui %230 : vector<8x1024xi1> to vector<8x1024xi32>
    %cst_45 = arith.constant dense<0> : vector<8xi32>
    %232 = vector.multi_reduction <add>, %231, %cst_45 [1] : vector<8x1024xi32> to vector<8xi32>
    %233 = vector.shape_cast %232 : vector<8xi32> to vector<8x1xi32>
    %c256_i32_46 = arith.constant 256 : i32
    %234 = vector.broadcast %c256_i32_46 : i32 to vector<8x1xi32>
    %235 = arith.cmpi sge, %233, %234 : vector<8x1xi32>
    %236 = arith.select %235, %228, %226 : vector<8x1xi1>, vector<8x1xi32>
    %c256_i32_47 = arith.constant 256 : i32
    %237 = vector.broadcast %c256_i32_47 : i32 to vector<8x1xi32>
    %238 = arith.ori %236, %237 : vector<8x1xi32>
    %239 = vector.broadcast %238 : vector<8x1xi32> to vector<8x1024xi32>
    %240 = arith.cmpi sge, %6, %239 : vector<8x1024xi32>
    %241 = arith.extui %240 : vector<8x1024xi1> to vector<8x1024xi32>
    %cst_48 = arith.constant dense<0> : vector<8xi32>
    %242 = vector.multi_reduction <add>, %241, %cst_48 [1] : vector<8x1024xi32> to vector<8xi32>
    %243 = vector.shape_cast %242 : vector<8xi32> to vector<8x1xi32>
    %c256_i32_49 = arith.constant 256 : i32
    %244 = vector.broadcast %c256_i32_49 : i32 to vector<8x1xi32>
    %245 = arith.cmpi sge, %243, %244 : vector<8x1xi32>
    %246 = arith.select %245, %238, %236 : vector<8x1xi1>, vector<8x1xi32>
    %c128_i32 = arith.constant 128 : i32
    %247 = vector.broadcast %c128_i32 : i32 to vector<8x1xi32>
    %248 = arith.ori %246, %247 : vector<8x1xi32>
    %249 = vector.broadcast %248 : vector<8x1xi32> to vector<8x1024xi32>
    %250 = arith.cmpi sge, %6, %249 : vector<8x1024xi32>
    %251 = arith.extui %250 : vector<8x1024xi1> to vector<8x1024xi32>
    %cst_50 = arith.constant dense<0> : vector<8xi32>
    %252 = vector.multi_reduction <add>, %251, %cst_50 [1] : vector<8x1024xi32> to vector<8xi32>
    %253 = vector.shape_cast %252 : vector<8xi32> to vector<8x1xi32>
    %c256_i32_51 = arith.constant 256 : i32
    %254 = vector.broadcast %c256_i32_51 : i32 to vector<8x1xi32>
    %255 = arith.cmpi sge, %253, %254 : vector<8x1xi32>
    %256 = arith.select %255, %248, %246 : vector<8x1xi1>, vector<8x1xi32>
    %c64_i32 = arith.constant 64 : i32
    %257 = vector.broadcast %c64_i32 : i32 to vector<8x1xi32>
    %258 = arith.ori %256, %257 : vector<8x1xi32>
    %259 = vector.broadcast %258 : vector<8x1xi32> to vector<8x1024xi32>
    %260 = arith.cmpi sge, %6, %259 : vector<8x1024xi32>
    %261 = arith.extui %260 : vector<8x1024xi1> to vector<8x1024xi32>
    %cst_52 = arith.constant dense<0> : vector<8xi32>
    %262 = vector.multi_reduction <add>, %261, %cst_52 [1] : vector<8x1024xi32> to vector<8xi32>
    %263 = vector.shape_cast %262 : vector<8xi32> to vector<8x1xi32>
    %c256_i32_53 = arith.constant 256 : i32
    %264 = vector.broadcast %c256_i32_53 : i32 to vector<8x1xi32>
    %265 = arith.cmpi sge, %263, %264 : vector<8x1xi32>
    %266 = arith.select %265, %258, %256 : vector<8x1xi1>, vector<8x1xi32>
    %c32_i32 = arith.constant 32 : i32
    %267 = vector.broadcast %c32_i32 : i32 to vector<8x1xi32>
    %268 = arith.ori %266, %267 : vector<8x1xi32>
    %269 = vector.broadcast %268 : vector<8x1xi32> to vector<8x1024xi32>
    %270 = arith.cmpi sge, %6, %269 : vector<8x1024xi32>
    %271 = arith.extui %270 : vector<8x1024xi1> to vector<8x1024xi32>
    %cst_54 = arith.constant dense<0> : vector<8xi32>
    %272 = vector.multi_reduction <add>, %271, %cst_54 [1] : vector<8x1024xi32> to vector<8xi32>
    %273 = vector.shape_cast %272 : vector<8xi32> to vector<8x1xi32>
    %c256_i32_55 = arith.constant 256 : i32
    %274 = vector.broadcast %c256_i32_55 : i32 to vector<8x1xi32>
    %275 = arith.cmpi sge, %273, %274 : vector<8x1xi32>
    %276 = arith.select %275, %268, %266 : vector<8x1xi1>, vector<8x1xi32>
    %c16_i32 = arith.constant 16 : i32
    %277 = vector.broadcast %c16_i32 : i32 to vector<8x1xi32>
    %278 = arith.ori %276, %277 : vector<8x1xi32>
    %279 = vector.broadcast %278 : vector<8x1xi32> to vector<8x1024xi32>
    %280 = arith.cmpi sge, %6, %279 : vector<8x1024xi32>
    %281 = arith.extui %280 : vector<8x1024xi1> to vector<8x1024xi32>
    %cst_56 = arith.constant dense<0> : vector<8xi32>
    %282 = vector.multi_reduction <add>, %281, %cst_56 [1] : vector<8x1024xi32> to vector<8xi32>
    %283 = vector.shape_cast %282 : vector<8xi32> to vector<8x1xi32>
    %c256_i32_57 = arith.constant 256 : i32
    %284 = vector.broadcast %c256_i32_57 : i32 to vector<8x1xi32>
    %285 = arith.cmpi sge, %283, %284 : vector<8x1xi32>
    %286 = arith.select %285, %278, %276 : vector<8x1xi1>, vector<8x1xi32>
    %c8_i32 = arith.constant 8 : i32
    %287 = vector.broadcast %c8_i32 : i32 to vector<8x1xi32>
    %288 = arith.ori %286, %287 : vector<8x1xi32>
    %289 = vector.broadcast %288 : vector<8x1xi32> to vector<8x1024xi32>
    %290 = arith.cmpi sge, %6, %289 : vector<8x1024xi32>
    %291 = arith.extui %290 : vector<8x1024xi1> to vector<8x1024xi32>
    %cst_58 = arith.constant dense<0> : vector<8xi32>
    %292 = vector.multi_reduction <add>, %291, %cst_58 [1] : vector<8x1024xi32> to vector<8xi32>
    %293 = vector.shape_cast %292 : vector<8xi32> to vector<8x1xi32>
    %c256_i32_59 = arith.constant 256 : i32
    %294 = vector.broadcast %c256_i32_59 : i32 to vector<8x1xi32>
    %295 = arith.cmpi sge, %293, %294 : vector<8x1xi32>
    %296 = arith.select %295, %288, %286 : vector<8x1xi1>, vector<8x1xi32>
    %c4_i32 = arith.constant 4 : i32
    %297 = vector.broadcast %c4_i32 : i32 to vector<8x1xi32>
    %298 = arith.ori %296, %297 : vector<8x1xi32>
    %299 = vector.broadcast %298 : vector<8x1xi32> to vector<8x1024xi32>
    %300 = arith.cmpi sge, %6, %299 : vector<8x1024xi32>
    %301 = arith.extui %300 : vector<8x1024xi1> to vector<8x1024xi32>
    %cst_60 = arith.constant dense<0> : vector<8xi32>
    %302 = vector.multi_reduction <add>, %301, %cst_60 [1] : vector<8x1024xi32> to vector<8xi32>
    %303 = vector.shape_cast %302 : vector<8xi32> to vector<8x1xi32>
    %c256_i32_61 = arith.constant 256 : i32
    %304 = vector.broadcast %c256_i32_61 : i32 to vector<8x1xi32>
    %305 = arith.cmpi sge, %303, %304 : vector<8x1xi32>
    %306 = arith.select %305, %298, %296 : vector<8x1xi1>, vector<8x1xi32>
    %c2_i32 = arith.constant 2 : i32
    %307 = vector.broadcast %c2_i32 : i32 to vector<8x1xi32>
    %308 = arith.ori %306, %307 : vector<8x1xi32>
    %309 = vector.broadcast %308 : vector<8x1xi32> to vector<8x1024xi32>
    %310 = arith.cmpi sge, %6, %309 : vector<8x1024xi32>
    %311 = arith.extui %310 : vector<8x1024xi1> to vector<8x1024xi32>
    %cst_62 = arith.constant dense<0> : vector<8xi32>
    %312 = vector.multi_reduction <add>, %311, %cst_62 [1] : vector<8x1024xi32> to vector<8xi32>
    %313 = vector.shape_cast %312 : vector<8xi32> to vector<8x1xi32>
    %c256_i32_63 = arith.constant 256 : i32
    %314 = vector.broadcast %c256_i32_63 : i32 to vector<8x1xi32>
    %315 = arith.cmpi sge, %313, %314 : vector<8x1xi32>
    %316 = arith.select %315, %308, %306 : vector<8x1xi1>, vector<8x1xi32>
    %c1_i32 = arith.constant 1 : i32
    %317 = vector.broadcast %c1_i32 : i32 to vector<8x1xi32>
    %318 = arith.ori %316, %317 : vector<8x1xi32>
    %319 = vector.broadcast %318 : vector<8x1xi32> to vector<8x1024xi32>
    %320 = arith.cmpi sge, %6, %319 : vector<8x1024xi32>
    %321 = arith.extui %320 : vector<8x1024xi1> to vector<8x1024xi32>
    %cst_64 = arith.constant dense<0> : vector<8xi32>
    %322 = vector.multi_reduction <add>, %321, %cst_64 [1] : vector<8x1024xi32> to vector<8xi32>
    %323 = vector.shape_cast %322 : vector<8xi32> to vector<8x1xi32>
    %c256_i32_65 = arith.constant 256 : i32
    %324 = vector.broadcast %c256_i32_65 : i32 to vector<8x1xi32>
    %325 = arith.cmpi sge, %323, %324 : vector<8x1xi32>
    %326 = arith.select %325, %318, %316 : vector<8x1xi1>, vector<8x1xi32>
    %327 = vector.broadcast %326 : vector<8x1xi32> to vector<8x1024xi32>
    %328 = arith.cmpi sge, %6, %327 : vector<8x1024xi32>
    %cst_66 = arith.constant 0x7F800000 : f32
    %329 = vector.broadcast %cst_66 : f32 to vector<8x1024xf32>
    %330 = arith.select %328, %0, %329 : vector<8x1024xi1>, vector<8x1024xf32>
    %cst_67 = arith.constant dense<0x7F800000> : vector<8xf32>
    %331 = vector.multi_reduction <minimumf>, %330, %cst_67 [1] : vector<8x1024xf32> to vector<8xf32>
    %332 = vector.shape_cast %331 : vector<8xf32> to vector<8x1xf32>
    %333 = vector.broadcast %326 : vector<8x1xi32> to vector<8x1024xi32>
    %334 = arith.cmpi sge, %6, %333 : vector<8x1024xi32>
    %335 = arith.extui %334 : vector<8x1024xi1> to vector<8x1024xi32>
    %cst_68 = arith.constant dense<0> : vector<8xi32>
    %336 = vector.multi_reduction <add>, %335, %cst_68 [1] : vector<8x1024xi32> to vector<8xi32>
    %337 = vector.shape_cast %336 : vector<8xi32> to vector<8x1xi32>
    %338 = vector.broadcast %326 : vector<8x1xi32> to vector<8x1024xi32>
    %339 = arith.cmpi slt, %6, %338 : vector<8x1024xi32>
    %cst_69 = arith.constant 0xFF800000 : f32
    %340 = vector.broadcast %cst_69 : f32 to vector<8x1024xf32>
    %341 = arith.select %339, %0, %340 : vector<8x1024xi1>, vector<8x1024xf32>
    %cst_70 = arith.constant dense<0xFF800000> : vector<8xf32>
    %342 = vector.multi_reduction <maximumf>, %341, %cst_70 [1] : vector<8x1024xf32> to vector<8xf32>
    %343 = vector.shape_cast %342 : vector<8xf32> to vector<8x1xf32>
    %c257_i32 = arith.constant 257 : i32
    %344 = vector.broadcast %c257_i32 : i32 to vector<8x1xi32>
    %345 = arith.cmpi sge, %337, %344 : vector<8x1xi32>
    %346 = arith.select %345, %332, %343 : vector<8x1xi1>, vector<8x1xf32>
    %347 = arith.addf %332, %346 : vector<8x1xf32>
    %cst_71 = arith.constant 5.000000e-01 : f32
    %348 = vector.broadcast %cst_71 : f32 to vector<8x1xf32>
    %349 = arith.mulf %348, %347 : vector<8x1xf32>
    %350 = vector.broadcast %349 : vector<8x1xf32> to vector<8x1024xf32>
    %351 = arith.subf %0, %350 : vector<8x1024xf32>
    %cst_72 = arith.constant 0.333333343 : f32
    %352 = vector.broadcast %cst_72 : f32 to vector<8x1024xf32>
    %353 = arith.mulf %352, %351 : vector<8x1024xf32>
    %cst_73 = arith.constant 5.000000e-01 : f32
    %354 = vector.broadcast %cst_73 : f32 to vector<8x1024xf32>
    %355 = arith.addf %353, %354 : vector<8x1024xf32>
    %cst_74 = arith.constant 0.000000e+00 : f32
    %cst_75 = arith.constant 1.000000e+00 : f32
    %356 = vector.broadcast %cst_74 : f32 to vector<8x1024xf32>
    %357 = arith.maximumf %356, %355 : vector<8x1024xf32>
    %358 = vector.broadcast %cst_75 : f32 to vector<8x1024xf32>
    %359 = arith.minimumf %358, %357 : vector<8x1024xf32>
    %c0_76 = arith.constant 0 : index
    %c0_77 = arith.constant 0 : index
    %360 = vector.load %arg2[%c0_76, %c0_77] : memref<8x1024xf32, #tpu.memory_space<vmem>>, vector<8x1024xf32>
    tpu.vector_store %arg2[%c0_76, %c0_77], %359 {strides = array<i32>} : memref<8x1024xf32, #tpu.memory_space<vmem>>, vector<8x1024xf32>,
    return
  }
  func.func @transform_0(%arg0: i32) -> (i32, i32) {
    %c0_i32 = arith.constant 0 : i32
    %c0_i32_0 = arith.constant 0 : i32
    return %arg0, %c0_i32 : i32, i32
  }
  func.func @transform_1(%arg0: i32) -> (i32, i32) {
    %c0_i32 = arith.constant 0 : i32
    %c0_i32_0 = arith.constant 0 : i32
    return %arg0, %c0_i32 : i32, i32
  }
}

</mosaic_0001>

<llo_original>
// kernel: tpu_custom_call.1
$region0: #{tpu_custom_call.1}
  #allocation0 [shape = 'u32[]', space=smem, size = 0x4, offset = 0x4, fixed_abs, tag = 'smem constant byte address 0x4 - core index']
  #allocation1 [shape = 'u32[144,128]{1,0:T(1,128)}', space=vmem, size = 0x12000, scoped, tag = 'internal scratch']
  %s0 = inlined_call_operand.hbm [shape: f32[8,1024], index: 0, kind: input, shape index: {}]
  %s1 = inlined_call_operand.hbm [shape: f32[8,1024], index: 1, kind: output, shape index: {}]
  %s2 = sld [smem:[#allocation0]]
  $region18: #{tpu_custom_call.1} parent=0
    _
  %s4 = ssub.s32 1, %s2
  %s5 = scalar_select 0, %s4, %s2
  $region1: #{tpu_custom_call.1} parent=0
    #allocation2 [shape = 'u8[32768]{0}', space=vmem, size = 0x8000, scoped, tag = 'input window, operand 0, single buffered']
    #allocation3 [shape = 's32[1]{0}', space=sflag, size = 0x4, scoped, tag = 'scoped memory for tpu_custom_call.1']
    #allocation4 [shape = 's32[1]{0}', space=sflag, size = 0x4, scoped, tag = 'scoped memory for tpu_custom_call.1']
    #allocation5 [shape = 'u8[32768]{0}', space=vmem, size = 0x8000, scoped, tag = 'output window, operand 0, single buffered']
    %6 = vsyncpa [#allocation3], 0
    %7 = vsyncpa [#allocation4], 0
    // Predicated region
    $region2: #{tpu_custom_call.1} parent=1 // pred_check
      _
    $region3: #{tpu_custom_call.1} parent=1 // pred_check_branch
      %9 = sbr.rel (0) target = $region5
    $region4: #{tpu_custom_call.1} parent=1 // pred_region
      %s11 = ssub.s32 1024, 1024
      %12 = vsyncadd [#allocation3], %s11
      %s14 = sshll.u32 [#allocation2], 4
      %s15 = int_to_ptr.vmem [resolvable:$true] %s14
      %17 = dma.hbm_to_vmem [thread:$0]  %s0, 1024, %s15, [#allocation3]
    $region5: #{tpu_custom_call.1} parent=1 // pred_fallthru
      _
    // Predicated region
    $region6: #{tpu_custom_call.1} parent=1 // pred_check
      _
    $region7: #{tpu_custom_call.1} parent=1 // pred_check_branch
      %19 = sbr.rel (0) target = $region9
    $region8: #{tpu_custom_call.1} parent=1 // pred_region
      %20 = dma.done [#allocation3], 1024
    $region9: #{tpu_custom_call.1} parent=1 // pred_fallthru
      _
    %v21 = vld [vmem:[#allocation2] sm:$0xff]
    %v22 = vld [vmem:[#allocation2 + $0x8] sm:$0xff]
    %v23 = vld [vmem:[#allocation2 + $0x10] sm:$0xff]
    %v24 = vld [vmem:[#allocation2 + $0x18] sm:$0xff]
    %v25 = vld [vmem:[#allocation2 + $0x20] sm:$0xff]
    %v26 = vld [vmem:[#allocation2 + $0x28] sm:$0xff]
    %v27 = vld [vmem:[#allocation2 + $0x30] sm:$0xff]
    %v28 = vld [vmem:[#allocation2 + $0x38] sm:$0xff]
    %vm37 = vcmp.lt.s32.totalorder %v21, 0
    %vm38 = vcmp.lt.s32.totalorder %v22, 0
    %vm39 = vcmp.lt.s32.totalorder %v23, 0
    %vm40 = vcmp.lt.s32.totalorder %v24, 0
    %vm41 = vcmp.lt.s32.totalorder %v25, 0
    %vm42 = vcmp.lt.s32.totalorder %v26, 0
    %vm43 = vcmp.lt.s32.totalorder %v27, 0
    %vm44 = vcmp.lt.s32.totalorder %v28, 0
    %v45 = vxor.u32 %v21, 2147483647
    %v46 = vxor.u32 %v22, 2147483647
    %v47 = vxor.u32 %v23, 2147483647
    %v48 = vxor.u32 %v24, 2147483647
    %v49 = vxor.u32 %v25, 2147483647
    %v50 = vxor.u32 %v26, 2147483647
    %v51 = vxor.u32 %v27, 2147483647
    %v52 = vxor.u32 %v28, 2147483647
    %v53 = vsel %vm37, %v45, %v21
    %v54 = vsel %vm38, %v46, %v22
    %v55 = vsel %vm39, %v47, %v23
    %v56 = vsel %vm40, %v48, %v24
    %v57 = vsel %vm41, %v49, %v25
    %v58 = vsel %vm42, %v50, %v26
    %v59 = vsel %vm43, %v51, %v27
    %v60 = vsel %vm44, %v52, %v28
    %vm61 = vcmp.ge.s32.totalorder %v53, 0
    %vm62 = vcmp.ge.s32.totalorder %v54, 0
    %vm63 = vcmp.ge.s32.totalorder %v55, 0
    %vm64 = vcmp.ge.s32.totalorder %v56, 0
    %vm65 = vcmp.ge.s32.totalorder %v57, 0
    %vm66 = vcmp.ge.s32.totalorder %v58, 0
    %vm67 = vcmp.ge.s32.totalorder %v59, 0
    %vm68 = vcmp.ge.s32.totalorder %v60, 0
    %v69 = vsel %vm61, 1, 0
    %v70 = vsel %vm62, 1, 0
    %v71 = vsel %vm63, 1, 0
    %v72 = vsel %vm64, 1, 0
    %v73 = vsel %vm65, 1, 0
    %v74 = vsel %vm66, 1, 0
    %v75 = vsel %vm67, 1, 0
    %v76 = vsel %vm68, 1, 0
    %v77 = vadd.s32 %v69, %v73
    %v78 = vadd.s32 %v70, %v74
    %v79 = vadd.s32 %v71, %v75
    %v80 = vadd.s32 %v72, %v76
    %v81 = vadd.s32 %v77, %v78
    %v82 = vadd.s32 %v79, %v80
    %v83 = vadd.s32 %v81, %v82
    %v84 = vand.u32 %v83, 65535
    %v85 = vshrl.u32 %v83, 16
    %v86 = vcvt.s32.f32 %v84
    %v87 = vcvt.s32.f32 %v85
    %88 = vadd.xlane.f32.xlu0 %v86
    %v89 = vpop.xlane.xlu0 %88
    %90 = vadd.xlane.f32.xlu0 %v87
    %v91 = vpop.xlane.xlu0 %90
    %v92 = vcvt.f32.s32 %v89
    %v93 = vcvt.f32.s32 %v91
    %v94 = vshll.u32 %v93, 16
    %v95 = vadd.s32 %v94, %v92
    %vm96 = vcmp.ge.s32.totalorder %v95, 256
    %v97 = vsel %vm96, 0, 2147483648
    %v98 = vor.u32 %v97, 1073741824
    %vm99 = vcmp.ge.s32.totalorder %v53, %v98
    %vm100 = vcmp.ge.s32.totalorder %v54, %v98
    %vm101 = vcmp.ge.s32.totalorder %v55, %v98
    %vm102 = vcmp.ge.s32.totalorder %v56, %v98
    %vm103 = vcmp.ge.s32.totalorder %v57, %v98
    %vm104 = vcmp.ge.s32.totalorder %v58, %v98
    %vm105 = vcmp.ge.s32.totalorder %v59, %v98
    %vm106 = vcmp.ge.s32.totalorder %v60, %v98
    %v107 = vsel %vm99, 1, 0
    %v108 = vsel %vm100, 1, 0
    %v109 = vsel %vm101, 1, 0
    %v110 = vsel %vm102, 1, 0
    %v111 = vsel %vm103, 1, 0
    %v112 = vsel %vm104, 1, 0
    %v113 = vsel %vm105, 1, 0
    %v114 = vsel %vm106, 1, 0
    %v115 = vadd.s32 %v107, %v111
    %v116 = vadd.s32 %v108, %v112
    %v117 = vadd.s32 %v109, %v113
    %v118 = vadd.s32 %v110, %v114
    %v119 = vadd.s32 %v115, %v116
    %v120 = vadd.s32 %v117, %v118
    %v121 = vadd.s32 %v119, %v120
    %v122 = vand.u32 %v121, 65535
    %v123 = vshrl.u32 %v121, 16
    %v124 = vcvt.s32.f32 %v122
    %v125 = vcvt.s32.f32 %v123
    %126 = vadd.xlane.f32.xlu0 %v124
    %v127 = vpop.xlane.xlu0 %126
    %128 = vadd.xlane.f32.xlu0 %v125
    %v129 = vpop.xlane.xlu0 %128
    %v130 = vcvt.f32.s32 %v127
    %v131 = vcvt.f32.s32 %v129
    %v132 = vshll.u32 %v131, 16
    %v133 = vadd.s32 %v132, %v130
    %vm134 = vcmp.ge.s32.totalorder %v133, 256
    %v135 = vsel %vm134, %v98, %v97
    %v136 = vor.u32 %v135, 536870912
    %vm137 = vcmp.ge.s32.totalorder %v53, %v136
    %vm138 = vcmp.ge.s32.totalorder %v54, %v136
    %vm139 = vcmp.ge.s32.totalorder %v55, %v136
    %vm140 = vcmp.ge.s32.totalorder %v56, %v136
    %vm141 = vcmp.ge.s32.totalorder %v57, %v136
    %vm142 = vcmp.ge.s32.totalorder %v58, %v136
    %vm143 = vcmp.ge.s32.totalorder %v59, %v136
    %vm144 = vcmp.ge.s32.totalorder %v60, %v136
    %v145 = vsel %vm137, 1, 0
    %v146 = vsel %vm138, 1, 0
    %v147 = vsel %vm139, 1, 0
    %v148 = vsel %vm140, 1, 0
    %v149 = vsel %vm141, 1, 0
    %v150 = vsel %vm142, 1, 0
    %v151 = vsel %vm143, 1, 0
    %v152 = vsel %vm144, 1, 0
    %v153 = vadd.s32 %v145, %v149
    %v154 = vadd.s32 %v146, %v150
    %v155 = vadd.s32 %v147, %v151
    %v156 = vadd.s32 %v148, %v152
    %v157 = vadd.s32 %v153, %v154
    %v158 = vadd.s32 %v155, %v156
    %v159 = vadd.s32 %v157, %v158
    %v160 = vand.u32 %v159, 65535
    %v161 = vshrl.u32 %v159, 16
    %v162 = vcvt.s32.f32 %v160
    %v163 = vcvt.s32.f32 %v161
    %164 = vadd.xlane.f32.xlu0 %v162
    %v165 = vpop.xlane.xlu0 %164
    %166 = vadd.xlane.f32.xlu0 %v163
    %v167 = vpop.xlane.xlu0 %166
    %v168 = vcvt.f32.s32 %v165
    %v169 = vcvt.f32.s32 %v167
    %v170 = vshll.u32 %v169, 16
    %v171 = vadd.s32 %v170, %v168
    %vm172 = vcmp.ge.s32.totalorder %v171, 256
    %v173 = vsel %vm172, %v136, %v135
    %v174 = vor.u32 %v173, 268435456
    %vm175 = vcmp.ge.s32.totalorder %v53, %v174
    %vm176 = vcmp.ge.s32.totalorder %v54, %v174
    %vm177 = vcmp.ge.s32.totalorder %v55, %v174
    %vm178 = vcmp.ge.s32.totalorder %v56, %v174
    %vm179 = vcmp.ge.s32.totalorder %v57, %v174
    %vm180 = vcmp.ge.s32.totalorder %v58, %v174
    %vm181 = vcmp.ge.s32.totalorder %v59, %v174
    %vm182 = vcmp.ge.s32.totalorder %v60, %v174
    %v183 = vsel %vm175, 1, 0
    %v184 = vsel %vm176, 1, 0
    %v185 = vsel %vm177, 1, 0
    %v186 = vsel %vm178, 1, 0
    %v187 = vsel %vm179, 1, 0
    %v188 = vsel %vm180, 1, 0
    %v189 = vsel %vm181, 1, 0
    %v190 = vsel %vm182, 1, 0
    %v191 = vadd.s32 %v183, %v187
    %v192 = vadd.s32 %v184, %v188
    %v193 = vadd.s32 %v185, %v189
    %v194 = vadd.s32 %v186, %v190
    %v195 = vadd.s32 %v191, %v192
    %v196 = vadd.s32 %v193, %v194
    %v197 = vadd.s32 %v195, %v196
    %v198 = vand.u32 %v197, 65535
    %v199 = vshrl.u32 %v197, 16
    %v200 = vcvt.s32.f32 %v198
    %v201 = vcvt.s32.f32 %v199
    %202 = vadd.xlane.f32.xlu0 %v200
    %v203 = vpop.xlane.xlu0 %202
    %204 = vadd.xlane.f32.xlu0 %v201
    %v205 = vpop.xlane.xlu0 %204
    %v206 = vcvt.f32.s32 %v203
    %v207 = vcvt.f32.s32 %v205
    %v208 = vshll.u32 %v207, 16
    %v209 = vadd.s32 %v208, %v206
    %vm210 = vcmp.ge.s32.totalorder %v209, 256
    %v211 = vsel %vm210, %v174, %v173
    %v212 = vor.u32 %v211, 134217728
    %vm213 = vcmp.ge.s32.totalorder %v53, %v212
    %vm214 = vcmp.ge.s32.totalorder %v54, %v212
    %vm215 = vcmp.ge.s32.totalorder %v55, %v212
    %vm216 = vcmp.ge.s32.totalorder %v56, %v212
    %vm217 = vcmp.ge.s32.totalorder %v57, %v212
    %vm218 = vcmp.ge.s32.totalorder %v58, %v212
    %vm219 = vcmp.ge.s32.totalorder %v59, %v212
    %vm220 = vcmp.ge.s32.totalorder %v60, %v212
    %v221 = vsel %vm213, 1, 0
    %v222 = vsel %vm214, 1, 0
    %v223 = vsel %vm215, 1, 0
    %v224 = vsel %vm216, 1, 0
    %v225 = vsel %vm217, 1, 0
    %v226 = vsel %vm218, 1, 0
    %v227 = vsel %vm219, 1, 0
    %v228 = vsel %vm220, 1, 0
    %v229 = vadd.s32 %v221, %v225
    %v230 = vadd.s32 %v222, %v226
    %v231 = vadd.s32 %v223, %v227
    %v232 = vadd.s32 %v224, %v228
    %v233 = vadd.s32 %v229, %v230
    %v234 = vadd.s32 %v231, %v232
    %v235 = vadd.s32 %v233, %v234
    %v236 = vand.u32 %v235, 65535
    %v237 = vshrl.u32 %v235, 16
    %v238 = vcvt.s32.f32 %v236
    %v239 = vcvt.s32.f32 %v237
    %240 = vadd.xlane.f32.xlu0 %v238
    %v241 = vpop.xlane.xlu0 %240
    %242 = vadd.xlane.f32.xlu0 %v239
    %v243 = vpop.xlane.xlu0 %242
    %v244 = vcvt.f32.s32 %v241
    %v245 = vcvt.f32.s32 %v243
    %v246 = vshll.u32 %v245, 16
    %v247 = vadd.s32 %v246, %v244
    %vm248 = vcmp.ge.s32.totalorder %v247, 256
    %v249 = vsel %vm248, %v212, %v211
    %v250 = vor.u32 %v249, 67108864
    %vm251 = vcmp.ge.s32.totalorder %v53, %v250
    %vm252 = vcmp.ge.s32.totalorder %v54, %v250
    %vm253 = vcmp.ge.s32.totalorder %v55, %v250
    %vm254 = vcmp.ge.s32.totalorder %v56, %v250
    %vm255 = vcmp.ge.s32.totalorder %v57, %v250
    %vm256 = vcmp.ge.s32.totalorder %v58, %v250
    %vm257 = vcmp.ge.s32.totalorder %v59, %v250
    %vm258 = vcmp.ge.s32.totalorder %v60, %v250
    %v259 = vsel %vm251, 1, 0
    %v260 = vsel %vm252, 1, 0
    %v261 = vsel %vm253, 1, 0
    %v262 = vsel %vm254, 1, 0
    %v263 = vsel %vm255, 1, 0
    %v264 = vsel %vm256, 1, 0
    %v265 = vsel %vm257, 1, 0
    %v266 = vsel %vm258, 1, 0
    %v267 = vadd.s32 %v259, %v263
    %v268 = vadd.s32 %v260, %v264
    %v269 = vadd.s32 %v261, %v265
    %v270 = vadd.s32 %v262, %v266
    %v271 = vadd.s32 %v267, %v268
    %v272 = vadd.s32 %v269, %v270
    %v273 = vadd.s32 %v271, %v272
    %v274 = vand.u32 %v273, 65535
    %v275 = vshrl.u32 %v273, 16
    %v276 = vcvt.s32.f32 %v274
    %v277 = vcvt.s32.f32 %v275
    %278 = vadd.xlane.f32.xlu0 %v276
    %v279 = vpop.xlane.xlu0 %278
    %280 = vadd.xlane.f32.xlu0 %v277
    %v281 = vpop.xlane.xlu0 %280
    %v282 = vcvt.f32.s32 %v279
    %v283 = vcvt.f32.s32 %v281
    %v284 = vshll.u32 %v283, 16
    %v285 = vadd.s32 %v284, %v282
    %vm286 = vcmp.ge.s32.totalorder %v285, 256
    %v287 = vsel %vm286, %v250, %v249
    %v288 = vor.u32 %v287, 33554432
    %vm289 = vcmp.ge.s32.totalorder %v53, %v288
    %vm290 = vcmp.ge.s32.totalorder %v54, %v288
    %vm291 = vcmp.ge.s32.totalorder %v55, %v288
    %vm292 = vcmp.ge.s32.totalorder %v56, %v288
    %vm293 = vcmp.ge.s32.totalorder %v57, %v288
    %vm294 = vcmp.ge.s32.totalorder %v58, %v288
    %vm295 = vcmp.ge.s32.totalorder %v59, %v288
    %vm296 = vcmp.ge.s32.totalorder %v60, %v288
    %v297 = vsel %vm289, 1, 0
    %v298 = vsel %vm290, 1, 0
    %v299 = vsel %vm291, 1, 0
    %v300 = vsel %vm292, 1, 0
    %v301 = vsel %vm293, 1, 0
    %v302 = vsel %vm294, 1, 0
    %v303 = vsel %vm295, 1, 0
    %v304 = vsel %vm296, 1, 0
    %v305 = vadd.s32 %v297, %v301
    %v306 = vadd.s32 %v298, %v302
    %v307 = vadd.s32 %v299, %v303
    %v308 = vadd.s32 %v300, %v304
    %v309 = vadd.s32 %v305, %v306
    %v310 = vadd.s32 %v307, %v308
    %v311 = vadd.s32 %v309, %v310
    %v312 = vand.u32 %v311, 65535
    %v313 = vshrl.u32 %v311, 16
    %v314 = vcvt.s32.f32 %v312
    %v315 = vcvt.s32.f32 %v313
    %316 = vadd.xlane.f32.xlu0 %v314
    %v317 = vpop.xlane.xlu0 %316
    %318 = vadd.xlane.f32.xlu0 %v315
    %v319 = vpop.xlane.xlu0 %318
    %v320 = vcvt.f32.s32 %v317
    %v321 = vcvt.f32.s32 %v319
    %v322 = vshll.u32 %v321, 16
    %v323 = vadd.s32 %v322, %v320
    %vm324 = vcmp.ge.s32.totalorder %v323, 256
    %v325 = vsel %vm324, %v288, %v287
    %v326 = vor.u32 %v325, 16777216
    %vm327 = vcmp.ge.s32.totalorder %v53, %v326
    %vm328 = vcmp.ge.s32.totalorder %v54, %v326
    %vm329 = vcmp.ge.s32.totalorder %v55, %v326
    %vm330 = vcmp.ge.s32.totalorder %v56, %v326
    %vm331 = vcmp.ge.s32.totalorder %v57, %v326
    %vm332 = vcmp.ge.s32.totalorder %v58, %v326
    %vm333 = vcmp.ge.s32.totalorder %v59, %v326
    %vm334 = vcmp.ge.s32.totalorder %v60, %v326
    %v335 = vsel %vm327, 1, 0
    %v336 = vsel %vm328, 1, 0
    %v337 = vsel %vm329, 1, 0
    %v338 = vsel %vm330, 1, 0
    %v339 = vsel %vm331, 1, 0
    %v340 = vsel %vm332, 1, 0
    %v341 = vsel %vm333, 1, 0
    %v342 = vsel %vm334, 1, 0
    %v343 = vadd.s32 %v335, %v339
    %v344 = vadd.s32 %v336, %v340
    %v345 = vadd.s32 %v337, %v341
    %v346 = vadd.s32 %v338, %v342
    %v347 = vadd.s32 %v343, %v344
    %v348 = vadd.s32 %v345, %v346
    %v349 = vadd.s32 %v347, %v348
    %v350 = vand.u32 %v349, 65535
    %v351 = vshrl.u32 %v349, 16
    %v352 = vcvt.s32.f32 %v350
    %v353 = vcvt.s32.f32 %v351
    %354 = vadd.xlane.f32.xlu0 %v352
    %v355 = vpop.xlane.xlu0 %354
    %356 = vadd.xlane.f32.xlu0 %v353
    %v357 = vpop.xlane.xlu0 %356
    %v358 = vcvt.f32.s32 %v355
    %v359 = vcvt.f32.s32 %v357
    %v360 = vshll.u32 %v359, 16
    %v361 = vadd.s32 %v360, %v358
    %vm362 = vcmp.ge.s32.totalorder %v361, 256
    %v363 = vsel %vm362, %v326, %v325
    %v364 = vor.u32 %v363, 8388608
    %vm365 = vcmp.ge.s32.totalorder %v53, %v364
    %vm366 = vcmp.ge.s32.totalorder %v54, %v364
    %vm367 = vcmp.ge.s32.totalorder %v55, %v364
    %vm368 = vcmp.ge.s32.totalorder %v56, %v364
    %vm369 = vcmp.ge.s32.totalorder %v57, %v364
    %vm370 = vcmp.ge.s32.totalorder %v58, %v364
    %vm371 = vcmp.ge.s32.totalorder %v59, %v364
    %vm372 = vcmp.ge.s32.totalorder %v60, %v364
    %v373 = vsel %vm365, 1, 0
    %v374 = vsel %vm366, 1, 0
    %v375 = vsel %vm367, 1, 0
    %v376 = vsel %vm368, 1, 0
    %v377 = vsel %vm369, 1, 0
    %v378 = vsel %vm370, 1, 0
    %v379 = vsel %vm371, 1, 0
    %v380 = vsel %vm372, 1, 0
    %v381 = vadd.s32 %v373, %v377
    %v382 = vadd.s32 %v374, %v378
    %v383 = vadd.s32 %v375, %v379
    %v384 = vadd.s32 %v376, %v380
    %v385 = vadd.s32 %v381, %v382
    %v386 = vadd.s32 %v383, %v384
    %v387 = vadd.s32 %v385, %v386
    %v388 = vand.u32 %v387, 65535
    %v389 = vshrl.u32 %v387, 16
    %v390 = vcvt.s32.f32 %v388
    %v391 = vcvt.s32.f32 %v389
    %392 = vadd.xlane.f32.xlu0 %v390
    %v393 = vpop.xlane.xlu0 %392
    %394 = vadd.xlane.f32.xlu0 %v391
    %v395 = vpop.xlane.xlu0 %394
    %v396 = vcvt.f32.s32 %v393
    %v397 = vcvt.f32.s32 %v395
    %v398 = vshll.u32 %v397, 16
    %v399 = vadd.s32 %v398, %v396
    %vm400 = vcmp.ge.s32.totalorder %v399, 256
    %v401 = vsel %vm400, %v364, %v363
    %v402 = vor.u32 %v401, 4194304
    %vm403 = vcmp.ge.s32.totalorder %v53, %v402
    %vm404 = vcmp.ge.s32.totalorder %v54, %v402
    %vm405 = vcmp.ge.s32.totalorder %v55, %v402
    %vm406 = vcmp.ge.s32.totalorder %v56, %v402
    %vm407 = vcmp.ge.s32.totalorder %v57, %v402
    %vm408 = vcmp.ge.s32.totalorder %v58, %v402
    %vm409 = vcmp.ge.s32.totalorder %v59, %v402
    %vm410 = vcmp.ge.s32.totalorder %v60, %v402
    %v411 = vsel %vm403, 1, 0
    %v412 = vsel %vm404, 1, 0
    %v413 = vsel %vm405, 1, 0
    %v414 = vsel %vm406, 1, 0
    %v415 = vsel %vm407, 1, 0
    %v416 = vsel %vm408, 1, 0
    %v417 = vsel %vm409, 1, 0
    %v418 = vsel %vm410, 1, 0
    %v419 = vadd.s32 %v411, %v415
    %v420 = vadd.s32 %v412, %v416
    %v421 = vadd.s32 %v413, %v417
    %v422 = vadd.s32 %v414, %v418
    %v423 = vadd.s32 %v419, %v420
    %v424 = vadd.s32 %v421, %v422
    %v425 = vadd.s32 %v423, %v424
    %v426 = vand.u32 %v425, 65535
    %v427 = vshrl.u32 %v425, 16
    %v428 = vcvt.s32.f32 %v426
    %v429 = vcvt.s32.f32 %v427
    %430 = vadd.xlane.f32.xlu0 %v428
    %v431 = vpop.xlane.xlu0 %430
    %432 = vadd.xlane.f32.xlu0 %v429
    %v433 = vpop.xlane.xlu0 %432
    %v434 = vcvt.f32.s32 %v431
    %v435 = vcvt.f32.s32 %v433
    %v436 = vshll.u32 %v435, 16
    %v437 = vadd.s32 %v436, %v434
    %vm438 = vcmp.ge.s32.totalorder %v437, 256
    %v439 = vsel %vm438, %v402, %v401
    %v440 = vor.u32 %v439, 2097152
    %vm441 = vcmp.ge.s32.totalorder %v53, %v440
    %vm442 = vcmp.ge.s32.totalorder %v54, %v440
    %vm443 = vcmp.ge.s32.totalorder %v55, %v440
    %vm444 = vcmp.ge.s32.totalorder %v56, %v440
    %vm445 = vcmp.ge.s32.totalorder %v57, %v440
    %vm446 = vcmp.ge.s32.totalorder %v58, %v440
    %vm447 = vcmp.ge.s32.totalorder %v59, %v440
    %vm448 = vcmp.ge.s32.totalorder %v60, %v440
    %v449 = vsel %vm441, 1, 0
    %v450 = vsel %vm442, 1, 0
    %v451 = vsel %vm443, 1, 0
    %v452 = vsel %vm444, 1, 0
    %v453 = vsel %vm445, 1, 0
    %v454 = vsel %vm446, 1, 0
    %v455 = vsel %vm447, 1, 0
    %v456 = vsel %vm448, 1, 0
    %v457 = vadd.s32 %v449, %v453
    %v458 = vadd.s32 %v450, %v454
    %v459 = vadd.s32 %v451, %v455
    %v460 = vadd.s32 %v452, %v456
    %v461 = vadd.s32 %v457, %v458
    %v462 = vadd.s32 %v459, %v460
    %v463 = vadd.s32 %v461, %v462
    %v464 = vand.u32 %v463, 65535
    %v465 = vshrl.u32 %v463, 16
    %v466 = vcvt.s32.f32 %v464
    %v467 = vcvt.s32.f32 %v465
    %468 = vadd.xlane.f32.xlu0 %v466
    %v469 = vpop.xlane.xlu0 %468
    %470 = vadd.xlane.f32.xlu0 %v467
    %v471 = vpop.xlane.xlu0 %470
    %v472 = vcvt.f32.s32 %v469
    %v473 = vcvt.f32.s32 %v471
    %v474 = vshll.u32 %v473, 16
    %v475 = vadd.s32 %v474, %v472
    %vm476 = vcmp.ge.s32.totalorder %v475, 256
    %v477 = vsel %vm476, %v440, %v439
    %v478 = vor.u32 %v477, 1048576
    %vm479 = vcmp.ge.s32.totalorder %v53, %v478
    %vm480 = vcmp.ge.s32.totalorder %v54, %v478
    %vm481 = vcmp.ge.s32.totalorder %v55, %v478
    %vm482 = vcmp.ge.s32.totalorder %v56, %v478
    %vm483 = vcmp.ge.s32.totalorder %v57, %v478
    %vm484 = vcmp.ge.s32.totalorder %v58, %v478
    %vm485 = vcmp.ge.s32.totalorder %v59, %v478
    %vm486 = vcmp.ge.s32.totalorder %v60, %v478
    %v487 = vsel %vm479, 1, 0
    %v488 = vsel %vm480, 1, 0
    %v489 = vsel %vm481, 1, 0
    %v490 = vsel %vm482, 1, 0
    %v491 = vsel %vm483, 1, 0
    %v492 = vsel %vm484, 1, 0
    %v493 = vsel %vm485, 1, 0
    %v494 = vsel %vm486, 1, 0
    %v495 = vadd.s32 %v487, %v491
    %v496 = vadd.s32 %v488, %v492
    %v497 = vadd.s32 %v489, %v493
    %v498 = vadd.s32 %v490, %v494
    %v499 = vadd.s32 %v495, %v496
    %v500 = vadd.s32 %v497, %v498
    %v501 = vadd.s32 %v499, %v500
    %v502 = vand.u32 %v501, 65535
    %v503 = vshrl.u32 %v501, 16
    %v504 = vcvt.s32.f32 %v502
    %v505 = vcvt.s32.f32 %v503
    %506 = vadd.xlane.f32.xlu0 %v504
    %v507 = vpop.xlane.xlu0 %506
    %508 = vadd.xlane.f32.xlu0 %v505
    %v509 = vpop.xlane.xlu0 %508
    %v510 = vcvt.f32.s32 %v507
    %v511 = vcvt.f32.s32 %v509
    %v512 = vshll.u32 %v511, 16
    %v513 = vadd.s32 %v512, %v510
    %vm514 = vcmp.ge.s32.totalorder %v513, 256
    %v515 = vsel %vm514, %v478, %v477
    %v516 = vor.u32 %v515, 524288
    %vm517 = vcmp.ge.s32.totalorder %v53, %v516
    %vm518 = vcmp.ge.s32.totalorder %v54, %v516
    %vm519 = vcmp.ge.s32.totalorder %v55, %v516
    %vm520 = vcmp.ge.s32.totalorder %v56, %v516
    %vm521 = vcmp.ge.s32.totalorder %v57, %v516
    %vm522 = vcmp.ge.s32.totalorder %v58, %v516
    %vm523 = vcmp.ge.s32.totalorder %v59, %v516
    %vm524 = vcmp.ge.s32.totalorder %v60, %v516
    %v525 = vsel %vm517, 1, 0
    %v526 = vsel %vm518, 1, 0
    %v527 = vsel %vm519, 1, 0
    %v528 = vsel %vm520, 1, 0
    %v529 = vsel %vm521, 1, 0
    %v530 = vsel %vm522, 1, 0
    %v531 = vsel %vm523, 1, 0
    %v532 = vsel %vm524, 1, 0
    %v533 = vadd.s32 %v525, %v529
    %v534 = vadd.s32 %v526, %v530
    %v535 = vadd.s32 %v527, %v531
    %v536 = vadd.s32 %v528, %v532
    %v537 = vadd.s32 %v533, %v534
    %v538 = vadd.s32 %v535, %v536
    %v539 = vadd.s32 %v537, %v538
    %v540 = vand.u32 %v539, 65535
    %v541 = vshrl.u32 %v539, 16
    %v542 = vcvt.s32.f32 %v540
    %v543 = vcvt.s32.f32 %v541
    %544 = vadd.xlane.f32.xlu0 %v542
    %v545 = vpop.xlane.xlu0 %544
    %546 = vadd.xlane.f32.xlu0 %v543
    %v547 = vpop.xlane.xlu0 %546
    %v548 = vcvt.f32.s32 %v545
    %v549 = vcvt.f32.s32 %v547
    %v550 = vshll.u32 %v549, 16
    %v551 = vadd.s32 %v550, %v548
    %vm552 = vcmp.ge.s32.totalorder %v551, 256
    %v553 = vsel %vm552, %v516, %v515
    %v554 = vor.u32 %v553, 262144
    %vm555 = vcmp.ge.s32.totalorder %v53, %v554
    %vm556 = vcmp.ge.s32.totalorder %v54, %v554
    %vm557 = vcmp.ge.s32.totalorder %v55, %v554
    %vm558 = vcmp.ge.s32.totalorder %v56, %v554
    %vm559 = vcmp.ge.s32.totalorder %v57, %v554
    %vm560 = vcmp.ge.s32.totalorder %v58, %v554
    %vm561 = vcmp.ge.s32.totalorder %v59, %v554
    %vm562 = vcmp.ge.s32.totalorder %v60, %v554
    %v563 = vsel %vm555, 1, 0
    %v564 = vsel %vm556, 1, 0
    %v565 = vsel %vm557, 1, 0
    %v566 = vsel %vm558, 1, 0
    %v567 = vsel %vm559, 1, 0
    %v568 = vsel %vm560, 1, 0
    %v569 = vsel %vm561, 1, 0
    %v570 = vsel %vm562, 1, 0
    %v571 = vadd.s32 %v563, %v567
    %v572 = vadd.s32 %v564, %v568
    %v573 = vadd.s32 %v565, %v569
    %v574 = vadd.s32 %v566, %v570
    %v575 = vadd.s32 %v571, %v572
    %v576 = vadd.s32 %v573, %v574
    %v577 = vadd.s32 %v575, %v576
    %v578 = vand.u32 %v577, 65535
    %v579 = vshrl.u32 %v577, 16
    %v580 = vcvt.s32.f32 %v578
    %v581 = vcvt.s32.f32 %v579
    %582 = vadd.xlane.f32.xlu0 %v580
    %v583 = vpop.xlane.xlu0 %582
    %584 = vadd.xlane.f32.xlu0 %v581
    %v585 = vpop.xlane.xlu0 %584
    %v586 = vcvt.f32.s32 %v583
    %v587 = vcvt.f32.s32 %v585
    %v588 = vshll.u32 %v587, 16
    %v589 = vadd.s32 %v588, %v586
    %vm590 = vcmp.ge.s32.totalorder %v589, 256
    %v591 = vsel %vm590, %v554, %v553
    %v592 = vor.u32 %v591, 131072
    %vm593 = vcmp.ge.s32.totalorder %v53, %v592
    %vm594 = vcmp.ge.s32.totalorder %v54, %v592
    %vm595 = vcmp.ge.s32.totalorder %v55, %v592
    %vm596 = vcmp.ge.s32.totalorder %v56, %v592
    %vm597 = vcmp.ge.s32.totalorder %v57, %v592
    %vm598 = vcmp.ge.s32.totalorder %v58, %v592
    %vm599 = vcmp.ge.s32.totalorder %v59, %v592
    %vm600 = vcmp.ge.s32.totalorder %v60, %v592
    %v601 = vsel %vm593, 1, 0
    %v602 = vsel %vm594, 1, 0
    %v603 = vsel %vm595, 1, 0
    %v604 = vsel %vm596, 1, 0
    %v605 = vsel %vm597, 1, 0
    %v606 = vsel %vm598, 1, 0
    %v607 = vsel %vm599, 1, 0
    %v608 = vsel %vm600, 1, 0
    %v609 = vadd.s32 %v601, %v605
    %v610 = vadd.s32 %v602, %v606
    %v611 = vadd.s32 %v603, %v607
    %v612 = vadd.s32 %v604, %v608
    %v613 = vadd.s32 %v609, %v610
    %v614 = vadd.s32 %v611, %v612
    %v615 = vadd.s32 %v613, %v614
    %v616 = vand.u32 %v615, 65535
    %v617 = vshrl.u32 %v615, 16
    %v618 = vcvt.s32.f32 %v616
    %v619 = vcvt.s32.f32 %v617
    %620 = vadd.xlane.f32.xlu0 %v618
    %v621 = vpop.xlane.xlu0 %620
    %622 = vadd.xlane.f32.xlu0 %v619
    %v623 = vpop.xlane.xlu0 %622
    %v624 = vcvt.f32.s32 %v621
    %v625 = vcvt.f32.s32 %v623
    %v626 = vshll.u32 %v625, 16
    %v627 = vadd.s32 %v626, %v624
    %vm628 = vcmp.ge.s32.totalorder %v627, 256
    %v629 = vsel %vm628, %v592, %v591
    %v630 = vor.u32 %v629, 65536
    %vm631 = vcmp.ge.s32.totalorder %v53, %v630
    %vm632 = vcmp.ge.s32.totalorder %v54, %v630
    %vm633 = vcmp.ge.s32.totalorder %v55, %v630
    %vm634 = vcmp.ge.s32.totalorder %v56, %v630
    %vm635 = vcmp.ge.s32.totalorder %v57, %v630
    %vm636 = vcmp.ge.s32.totalorder %v58, %v630
    %vm637 = vcmp.ge.s32.totalorder %v59, %v630
    %vm638 = vcmp.ge.s32.totalorder %v60, %v630
    %v639 = vsel %vm631, 1, 0
    %v640 = vsel %vm632, 1, 0
    %v641 = vsel %vm633, 1, 0
    %v642 = vsel %vm634, 1, 0
    %v643 = vsel %vm635, 1, 0
    %v644 = vsel %vm636, 1, 0
    %v645 = vsel %vm637, 1, 0
    %v646 = vsel %vm638, 1, 0
    %v647 = vadd.s32 %v639, %v643
    %v648 = vadd.s32 %v640, %v644
    %v649 = vadd.s32 %v641, %v645
    %v650 = vadd.s32 %v642, %v646
    %v651 = vadd.s32 %v647, %v648
    %v652 = vadd.s32 %v649, %v650
    %v653 = vadd.s32 %v651, %v652
    %v654 = vand.u32 %v653, 65535
    %v655 = vshrl.u32 %v653, 16
    %v656 = vcvt.s32.f32 %v654
    %v657 = vcvt.s32.f32 %v655
    %658 = vadd.xlane.f32.xlu0 %v656
    %v659 = vpop.xlane.xlu0 %658
    %660 = vadd.xlane.f32.xlu0 %v657
    %v661 = vpop.xlane.xlu0 %660
    %v662 = vcvt.f32.s32 %v659
    %v663 = vcvt.f32.s32 %v661
    %v664 = vshll.u32 %v663, 16
    %v665 = vadd.s32 %v664, %v662
    %vm666 = vcmp.ge.s32.totalorder %v665, 256
    %v667 = vsel %vm666, %v630, %v629
    %v668 = vor.u32 %v667, 32768
    %vm669 = vcmp.ge.s32.totalorder %v53, %v668
    %vm670 = vcmp.ge.s32.totalorder %v54, %v668
    %vm671 = vcmp.ge.s32.totalorder %v55, %v668
    %vm672 = vcmp.ge.s32.totalorder %v56, %v668
    %vm673 = vcmp.ge.s32.totalorder %v57, %v668
    %vm674 = vcmp.ge.s32.totalorder %v58, %v668
    %vm675 = vcmp.ge.s32.totalorder %v59, %v668
    %vm676 = vcmp.ge.s32.totalorder %v60, %v668
    %v677 = vsel %vm669, 1, 0
    %v678 = vsel %vm670, 1, 0
    %v679 = vsel %vm671, 1, 0
    %v680 = vsel %vm672, 1, 0
    %v681 = vsel %vm673, 1, 0
    %v682 = vsel %vm674, 1, 0
    %v683 = vsel %vm675, 1, 0
    %v684 = vsel %vm676, 1, 0
    %v685 = vadd.s32 %v677, %v681
    %v686 = vadd.s32 %v678, %v682
    %v687 = vadd.s32 %v679, %v683
    %v688 = vadd.s32 %v680, %v684
    %v689 = vadd.s32 %v685, %v686
    %v690 = vadd.s32 %v687, %v688
    %v691 = vadd.s32 %v689, %v690
    %v692 = vand.u32 %v691, 65535
    %v693 = vshrl.u32 %v691, 16
    %v694 = vcvt.s32.f32 %v692
    %v695 = vcvt.s32.f32 %v693
    %696 = vadd.xlane.f32.xlu0 %v694
    %v697 = vpop.xlane.xlu0 %696
    %698 = vadd.xlane.f32.xlu0 %v695
    %v699 = vpop.xlane.xlu0 %698
    %v700 = vcvt.f32.s32 %v697
    %v701 = vcvt.f32.s32 %v699
    %v702 = vshll.u32 %v701, 16
    %v703 = vadd.s32 %v702, %v700
    %vm704 = vcmp.ge.s32.totalorder %v703, 256
    %v705 = vsel %vm704, %v668, %v667
    %v706 = vor.u32 %v705, 16384
    %vm707 = vcmp.ge.s32.totalorder %v53, %v706
    %vm708 = vcmp.ge.s32.totalorder %v54, %v706
    %vm709 = vcmp.ge.s32.totalorder %v55, %v706
    %vm710 = vcmp.ge.s32.totalorder %v56, %v706
    %vm711 = vcmp.ge.s32.totalorder %v57, %v706
    %vm712 = vcmp.ge.s32.totalorder %v58, %v706
    %vm713 = vcmp.ge.s32.totalorder %v59, %v706
    %vm714 = vcmp.ge.s32.totalorder %v60, %v706
    %v715 = vsel %vm707, 1, 0
    %v716 = vsel %vm708, 1, 0
    %v717 = vsel %vm709, 1, 0
    %v718 = vsel %vm710, 1, 0
    %v719 = vsel %vm711, 1, 0
    %v720 = vsel %vm712, 1, 0
    %v721 = vsel %vm713, 1, 0
    %v722 = vsel %vm714, 1, 0
    %v723 = vadd.s32 %v715, %v719
    %v724 = vadd.s32 %v716, %v720
    %v725 = vadd.s32 %v717, %v721
    %v726 = vadd.s32 %v718, %v722
    %v727 = vadd.s32 %v723, %v724
    %v728 = vadd.s32 %v725, %v726
    %v729 = vadd.s32 %v727, %v728
    %v730 = vand.u32 %v729, 65535
    %v731 = vshrl.u32 %v729, 16
    %v732 = vcvt.s32.f32 %v730
    %v733 = vcvt.s32.f32 %v731
    %734 = vadd.xlane.f32.xlu0 %v732
    %v735 = vpop.xlane.xlu0 %734
    %736 = vadd.xlane.f32.xlu0 %v733
    %v737 = vpop.xlane.xlu0 %736
    %v738 = vcvt.f32.s32 %v735
    %v739 = vcvt.f32.s32 %v737
    %v740 = vshll.u32 %v739, 16
    %v741 = vadd.s32 %v740, %v738
    %vm742 = vcmp.ge.s32.totalorder %v741, 256
    %v743 = vsel %vm742, %v706, %v705
    %v744 = vor.u32 %v743, 8192
    %vm745 = vcmp.ge.s32.totalorder %v53, %v744
    %vm746 = vcmp.ge.s32.totalorder %v54, %v744
    %vm747 = vcmp.ge.s32.totalorder %v55, %v744
    %vm748 = vcmp.ge.s32.totalorder %v56, %v744
    %vm749 = vcmp.ge.s32.totalorder %v57, %v744
    %vm750 = vcmp.ge.s32.totalorder %v58, %v744
    %vm751 = vcmp.ge.s32.totalorder %v59, %v744
    %vm752 = vcmp.ge.s32.totalorder %v60, %v744
    %v753 = vsel %vm745, 1, 0
    %v754 = vsel %vm746, 1, 0
    %v755 = vsel %vm747, 1, 0
    %v756 = vsel %vm748, 1, 0
    %v757 = vsel %vm749, 1, 0
    %v758 = vsel %vm750, 1, 0
    %v759 = vsel %vm751, 1, 0
    %v760 = vsel %vm752, 1, 0
    %v761 = vadd.s32 %v753, %v757
    %v762 = vadd.s32 %v754, %v758
    %v763 = vadd.s32 %v755, %v759
    %v764 = vadd.s32 %v756, %v760
    %v765 = vadd.s32 %v761, %v762
    %v766 = vadd.s32 %v763, %v764
    %v767 = vadd.s32 %v765, %v766
    %v768 = vand.u32 %v767, 65535
    %v769 = vshrl.u32 %v767, 16
    %v770 = vcvt.s32.f32 %v768
    %v771 = vcvt.s32.f32 %v769
    %772 = vadd.xlane.f32.xlu0 %v770
    %v773 = vpop.xlane.xlu0 %772
    %774 = vadd.xlane.f32.xlu0 %v771
    %v775 = vpop.xlane.xlu0 %774
    %v776 = vcvt.f32.s32 %v773
    %v777 = vcvt.f32.s32 %v775
    %v778 = vshll.u32 %v777, 16
    %v779 = vadd.s32 %v778, %v776
    %vm780 = vcmp.ge.s32.totalorder %v779, 256
    %v781 = vsel %vm780, %v744, %v743
    %v782 = vor.u32 %v781, 4096
    %vm783 = vcmp.ge.s32.totalorder %v53, %v782
    %vm784 = vcmp.ge.s32.totalorder %v54, %v782
    %vm785 = vcmp.ge.s32.totalorder %v55, %v782
    %vm786 = vcmp.ge.s32.totalorder %v56, %v782
    %vm787 = vcmp.ge.s32.totalorder %v57, %v782
    %vm788 = vcmp.ge.s32.totalorder %v58, %v782
    %vm789 = vcmp.ge.s32.totalorder %v59, %v782
    %vm790 = vcmp.ge.s32.totalorder %v60, %v782
    %v791 = vsel %vm783, 1, 0
    %v792 = vsel %vm784, 1, 0
    %v793 = vsel %vm785, 1, 0
    %v794 = vsel %vm786, 1, 0
    %v795 = vsel %vm787, 1, 0
    %v796 = vsel %vm788, 1, 0
    %v797 = vsel %vm789, 1, 0
    %v798 = vsel %vm790, 1, 0
    %v799 = vadd.s32 %v791, %v795
    %v800 = vadd.s32 %v792, %v796
    %v801 = vadd.s32 %v793, %v797
    %v802 = vadd.s32 %v794, %v798
    %v803 = vadd.s32 %v799, %v800
    %v804 = vadd.s32 %v801, %v802
    %v805 = vadd.s32 %v803, %v804
    %v806 = vand.u32 %v805, 65535
    %v807 = vshrl.u32 %v805, 16
    %v808 = vcvt.s32.f32 %v806
    %v809 = vcvt.s32.f32 %v807
    %810 = vadd.xlane.f32.xlu0 %v808
    %v811 = vpop.xlane.xlu0 %810
    %812 = vadd.xlane.f32.xlu0 %v809
    %v813 = vpop.xlane.xlu0 %812
    %v814 = vcvt.f32.s32 %v811
    %v815 = vcvt.f32.s32 %v813
    %v816 = vshll.u32 %v815, 16
    %v817 = vadd.s32 %v816, %v814
    %vm818 = vcmp.ge.s32.totalorder %v817, 256
    %v819 = vsel %vm818, %v782, %v781
    %v820 = vor.u32 %v819, 2048
    %vm821 = vcmp.ge.s32.totalorder %v53, %v820
    %vm822 = vcmp.ge.s32.totalorder %v54, %v820
    %vm823 = vcmp.ge.s32.totalorder %v55, %v820
    %vm824 = vcmp.ge.s32.totalorder %v56, %v820
    %vm825 = vcmp.ge.s32.totalorder %v57, %v820
    %vm826 = vcmp.ge.s32.totalorder %v58, %v820
    %vm827 = vcmp.ge.s32.totalorder %v59, %v820
    %vm828 = vcmp.ge.s32.totalorder %v60, %v820
    %v829 = vsel %vm821, 1, 0
    %v830 = vsel %vm822, 1, 0
    %v831 = vsel %vm823, 1, 0
    %v832 = vsel %vm824, 1, 0
    %v833 = vsel %vm825, 1, 0
    %v834 = vsel %vm826, 1, 0
    %v835 = vsel %vm827, 1, 0
    %v836 = vsel %vm828, 1, 0
    %v837 = vadd.s32 %v829, %v833
    %v838 = vadd.s32 %v830, %v834
    %v839 = vadd.s32 %v831, %v835
    %v840 = vadd.s32 %v832, %v836
    %v841 = vadd.s32 %v837, %v838
    %v842 = vadd.s32 %v839, %v840
    %v843 = vadd.s32 %v841, %v842
    %v844 = vand.u32 %v843, 65535
    %v845 = vshrl.u32 %v843, 16
    %v846 = vcvt.s32.f32 %v844
    %v847 = vcvt.s32.f32 %v845
    %848 = vadd.xlane.f32.xlu0 %v846
    %v849 = vpop.xlane.xlu0 %848
    %850 = vadd.xlane.f32.xlu0 %v847
    %v851 = vpop.xlane.xlu0 %850
    %v852 = vcvt.f32.s32 %v849
    %v853 = vcvt.f32.s32 %v851
    %v854 = vshll.u32 %v853, 16
    %v855 = vadd.s32 %v854, %v852
    %vm856 = vcmp.ge.s32.totalorder %v855, 256
    %v857 = vsel %vm856, %v820, %v819
    %v858 = vor.u32 %v857, 1024
    %vm859 = vcmp.ge.s32.totalorder %v53, %v858
    %vm860 = vcmp.ge.s32.totalorder %v54, %v858
    %vm861 = vcmp.ge.s32.totalorder %v55, %v858
    %vm862 = vcmp.ge.s32.totalorder %v56, %v858
    %vm863 = vcmp.ge.s32.totalorder %v57, %v858
    %vm864 = vcmp.ge.s32.totalorder %v58, %v858
    %vm865 = vcmp.ge.s32.totalorder %v59, %v858
    %vm866 = vcmp.ge.s32.totalorder %v60, %v858
    %v867 = vsel %vm859, 1, 0
    %v868 = vsel %vm860, 1, 0
    %v869 = vsel %vm861, 1, 0
    %v870 = vsel %vm862, 1, 0
    %v871 = vsel %vm863, 1, 0
    %v872 = vsel %vm864, 1, 0
    %v873 = vsel %vm865, 1, 0
    %v874 = vsel %vm866, 1, 0
    %v875 = vadd.s32 %v867, %v871
    %v876 = vadd.s32 %v868, %v872
    %v877 = vadd.s32 %v869, %v873
    %v878 = vadd.s32 %v870, %v874
    %v879 = vadd.s32 %v875, %v876
    %v880 = vadd.s32 %v877, %v878
    %v881 = vadd.s32 %v879, %v880
    %v882 = vand.u32 %v881, 65535
    %v883 = vshrl.u32 %v881, 16
    %v884 = vcvt.s32.f32 %v882
    %v885 = vcvt.s32.f32 %v883
    %886 = vadd.xlane.f32.xlu0 %v884
    %v887 = vpop.xlane.xlu0 %886
    %888 = vadd.xlane.f32.xlu0 %v885
    %v889 = vpop.xlane.xlu0 %888
    %v890 = vcvt.f32.s32 %v887
    %v891 = vcvt.f32.s32 %v889
    %v892 = vshll.u32 %v891, 16
    %v893 = vadd.s32 %v892, %v890
    %vm894 = vcmp.ge.s32.totalorder %v893, 256
    %v895 = vsel %vm894, %v858, %v857
    %v896 = vor.u32 %v895, 512
    %vm897 = vcmp.ge.s32.totalorder %v53, %v896
    %vm898 = vcmp.ge.s32.totalorder %v54, %v896
    %vm899 = vcmp.ge.s32.totalorder %v55, %v896
    %vm900 = vcmp.ge.s32.totalorder %v56, %v896
    %vm901 = vcmp.ge.s32.totalorder %v57, %v896
    %vm902 = vcmp.ge.s32.totalorder %v58, %v896
    %vm903 = vcmp.ge.s32.totalorder %v59, %v896
    %vm904 = vcmp.ge.s32.totalorder %v60, %v896
    %v905 = vsel %vm897, 1, 0
    %v906 = vsel %vm898, 1, 0
    %v907 = vsel %vm899, 1, 0
    %v908 = vsel %vm900, 1, 0
    %v909 = vsel %vm901, 1, 0
    %v910 = vsel %vm902, 1, 0
    %v911 = vsel %vm903, 1, 0
    %v912 = vsel %vm904, 1, 0
    %v913 = vadd.s32 %v905, %v909
    %v914 = vadd.s32 %v906, %v910
    %v915 = vadd.s32 %v907, %v911
    %v916 = vadd.s32 %v908, %v912
    %v917 = vadd.s32 %v913, %v914
    %v918 = vadd.s32 %v915, %v916
    %v919 = vadd.s32 %v917, %v918
    %v920 = vand.u32 %v919, 65535
    %v921 = vshrl.u32 %v919, 16
    %v922 = vcvt.s32.f32 %v920
    %v923 = vcvt.s32.f32 %v921
    %924 = vadd.xlane.f32.xlu0 %v922
    %v925 = vpop.xlane.xlu0 %924
    %926 = vadd.xlane.f32.xlu0 %v923
    %v927 = vpop.xlane.xlu0 %926
    %v928 = vcvt.f32.s32 %v925
    %v929 = vcvt.f32.s32 %v927
    %v930 = vshll.u32 %v929, 16
    %v931 = vadd.s32 %v930, %v928
    %vm932 = vcmp.ge.s32.totalorder %v931, 256
    %v933 = vsel %vm932, %v896, %v895
    %v934 = vor.u32 %v933, 256
    %vm935 = vcmp.ge.s32.totalorder %v53, %v934
    %vm936 = vcmp.ge.s32.totalorder %v54, %v934
    %vm937 = vcmp.ge.s32.totalorder %v55, %v934
    %vm938 = vcmp.ge.s32.totalorder %v56, %v934
    %vm939 = vcmp.ge.s32.totalorder %v57, %v934
    %vm940 = vcmp.ge.s32.totalorder %v58, %v934
    %vm941 = vcmp.ge.s32.totalorder %v59, %v934
    %vm942 = vcmp.ge.s32.totalorder %v60, %v934
    %v943 = vsel %vm935, 1, 0
    %v944 = vsel %vm936, 1, 0
    %v945 = vsel %vm937, 1, 0
    %v946 = vsel %vm938, 1, 0
    %v947 = vsel %vm939, 1, 0
    %v948 = vsel %vm940, 1, 0
    %v949 = vsel %vm941, 1, 0
    %v950 = vsel %vm942, 1, 0
    %v951 = vadd.s32 %v943, %v947
    %v952 = vadd.s32 %v944, %v948
    %v953 = vadd.s32 %v945, %v949
    %v954 = vadd.s32 %v946, %v950
    %v955 = vadd.s32 %v951, %v952
    %v956 = vadd.s32 %v953, %v954
    %v957 = vadd.s32 %v955, %v956
    %v958 = vand.u32 %v957, 65535
    %v959 = vshrl.u32 %v957, 16
    %v960 = vcvt.s32.f32 %v958
    %v961 = vcvt.s32.f32 %v959
    %962 = vadd.xlane.f32.xlu0 %v960
    %v963 = vpop.xlane.xlu0 %962
    %964 = vadd.xlane.f32.xlu0 %v961
    %v965 = vpop.xlane.xlu0 %964
    %v966 = vcvt.f32.s32 %v963
    %v967 = vcvt.f32.s32 %v965
    %v968 = vshll.u32 %v967, 16
    %v969 = vadd.s32 %v968, %v966
    %vm970 = vcmp.ge.s32.totalorder %v969, 256
    %v971 = vsel %vm970, %v934, %v933
    %v972 = vor.u32 %v971, 128
    %vm973 = vcmp.ge.s32.totalorder %v53, %v972
    %vm974 = vcmp.ge.s32.totalorder %v54, %v972
    %vm975 = vcmp.ge.s32.totalorder %v55, %v972
    %vm976 = vcmp.ge.s32.totalorder %v56, %v972
    %vm977 = vcmp.ge.s32.totalorder %v57, %v972
    %vm978 = vcmp.ge.s32.totalorder %v58, %v972
    %vm979 = vcmp.ge.s32.totalorder %v59, %v972
    %vm980 = vcmp.ge.s32.totalorder %v60, %v972
    %v981 = vsel %vm973, 1, 0
    %v982 = vsel %vm974, 1, 0
    %v983 = vsel %vm975, 1, 0
    %v984 = vsel %vm976, 1, 0
    %v985 = vsel %vm977, 1, 0
    %v986 = vsel %vm978, 1, 0
    %v987 = vsel %vm979, 1, 0
    %v988 = vsel %vm980, 1, 0
    %v989 = vadd.s32 %v981, %v985
    %v990 = vadd.s32 %v982, %v986
    %v991 = vadd.s32 %v983, %v987
    %v992 = vadd.s32 %v984, %v988
    %v993 = vadd.s32 %v989, %v990
    %v994 = vadd.s32 %v991, %v992
    %v995 = vadd.s32 %v993, %v994
    %v996 = vand.u32 %v995, 65535
    %v997 = vshrl.u32 %v995, 16
    %v998 = vcvt.s32.f32 %v996
    %v999 = vcvt.s32.f32 %v997
    %1000 = vadd.xlane.f32.xlu0 %v998
    %v1001 = vpop.xlane.xlu0 %1000
    %1002 = vadd.xlane.f32.xlu0 %v999
    %v1003 = vpop.xlane.xlu0 %1002
    %v1004 = vcvt.f32.s32 %v1001
    %v1005 = vcvt.f32.s32 %v1003
    %v1006 = vshll.u32 %v1005, 16
    %v1007 = vadd.s32 %v1006, %v1004
    %vm1008 = vcmp.ge.s32.totalorder %v1007, 256
    %v1009 = vsel %vm1008, %v972, %v971
    %v1010 = vor.u32 %v1009, 64
    %vm1011 = vcmp.ge.s32.totalorder %v53, %v1010
    %vm1012 = vcmp.ge.s32.totalorder %v54, %v1010
    %vm1013 = vcmp.ge.s32.totalorder %v55, %v1010
    %vm1014 = vcmp.ge.s32.totalorder %v56, %v1010
    %vm1015 = vcmp.ge.s32.totalorder %v57, %v1010
    %vm1016 = vcmp.ge.s32.totalorder %v58, %v1010
    %vm1017 = vcmp.ge.s32.totalorder %v59, %v1010
    %vm1018 = vcmp.ge.s32.totalorder %v60, %v1010
    %v1019 = vsel %vm1011, 1, 0
    %v1020 = vsel %vm1012, 1, 0
    %v1021 = vsel %vm1013, 1, 0
    %v1022 = vsel %vm1014, 1, 0
    %v1023 = vsel %vm1015, 1, 0
    %v1024 = vsel %vm1016, 1, 0
    %v1025 = vsel %vm1017, 1, 0
    %v1026 = vsel %vm1018, 1, 0
    %v1027 = vadd.s32 %v1019, %v1023
    %v1028 = vadd.s32 %v1020, %v1024
    %v1029 = vadd.s32 %v1021, %v1025
    %v1030 = vadd.s32 %v1022, %v1026
    %v1031 = vadd.s32 %v1027, %v1028
    %v1032 = vadd.s32 %v1029, %v1030
    %v1033 = vadd.s32 %v1031, %v1032
    %v1034 = vand.u32 %v1033, 65535
    %v1035 = vshrl.u32 %v1033, 16
    %v1036 = vcvt.s32.f32 %v1034
    %v1037 = vcvt.s32.f32 %v1035
    %1038 = vadd.xlane.f32.xlu0 %v1036
    %v1039 = vpop.xlane.xlu0 %1038
    %1040 = vadd.xlane.f32.xlu0 %v1037
    %v1041 = vpop.xlane.xlu0 %1040
    %v1042 = vcvt.f32.s32 %v1039
    %v1043 = vcvt.f32.s32 %v1041
    %v1044 = vshll.u32 %v1043, 16
    %v1045 = vadd.s32 %v1044, %v1042
    %vm1046 = vcmp.ge.s32.totalorder %v1045, 256
    %v1047 = vsel %vm1046, %v1010, %v1009
    %v1048 = vor.u32 %v1047, 32
    %vm1049 = vcmp.ge.s32.totalorder %v53, %v1048
    %vm1050 = vcmp.ge.s32.totalorder %v54, %v1048
    %vm1051 = vcmp.ge.s32.totalorder %v55, %v1048
    %vm1052 = vcmp.ge.s32.totalorder %v56, %v1048
    %vm1053 = vcmp.ge.s32.totalorder %v57, %v1048
    %vm1054 = vcmp.ge.s32.totalorder %v58, %v1048
    %vm1055 = vcmp.ge.s32.totalorder %v59, %v1048
    %vm1056 = vcmp.ge.s32.totalorder %v60, %v1048
    %v1057 = vsel %vm1049, 1, 0
    %v1058 = vsel %vm1050, 1, 0
    %v1059 = vsel %vm1051, 1, 0
    %v1060 = vsel %vm1052, 1, 0
    %v1061 = vsel %vm1053, 1, 0
    %v1062 = vsel %vm1054, 1, 0
    %v1063 = vsel %vm1055, 1, 0
    %v1064 = vsel %vm1056, 1, 0
    %v1065 = vadd.s32 %v1057, %v1061
    %v1066 = vadd.s32 %v1058, %v1062
    %v1067 = vadd.s32 %v1059, %v1063
    %v1068 = vadd.s32 %v1060, %v1064
    %v1069 = vadd.s32 %v1065, %v1066
    %v1070 = vadd.s32 %v1067, %v1068
    %v1071 = vadd.s32 %v1069, %v1070
    %v1072 = vand.u32 %v1071, 65535
    %v1073 = vshrl.u32 %v1071, 16
    %v1074 = vcvt.s32.f32 %v1072
    %v1075 = vcvt.s32.f32 %v1073
    %1076 = vadd.xlane.f32.xlu0 %v1074
    %v1077 = vpop.xlane.xlu0 %1076
    %1078 = vadd.xlane.f32.xlu0 %v1075
    %v1079 = vpop.xlane.xlu0 %1078
    %v1080 = vcvt.f32.s32 %v1077
    %v1081 = vcvt.f32.s32 %v1079
    %v1082 = vshll.u32 %v1081, 16
    %v1083 = vadd.s32 %v1082, %v1080
    %vm1084 = vcmp.ge.s32.totalorder %v1083, 256
    %v1085 = vsel %vm1084, %v1048, %v1047
    %v1086 = vor.u32 %v1085, 16
    %vm1087 = vcmp.ge.s32.totalorder %v53, %v1086
    %vm1088 = vcmp.ge.s32.totalorder %v54, %v1086
    %vm1089 = vcmp.ge.s32.totalorder %v55, %v1086
    %vm1090 = vcmp.ge.s32.totalorder %v56, %v1086
    %vm1091 = vcmp.ge.s32.totalorder %v57, %v1086
    %vm1092 = vcmp.ge.s32.totalorder %v58, %v1086
    %vm1093 = vcmp.ge.s32.totalorder %v59, %v1086
    %vm1094 = vcmp.ge.s32.totalorder %v60, %v1086
    %v1095 = vsel %vm1087, 1, 0
    %v1096 = vsel %vm1088, 1, 0
    %v1097 = vsel %vm1089, 1, 0
    %v1098 = vsel %vm1090, 1, 0
    %v1099 = vsel %vm1091, 1, 0
    %v1100 = vsel %vm1092, 1, 0
    %v1101 = vsel %vm1093, 1, 0
    %v1102 = vsel %vm1094, 1, 0
    %v1103 = vadd.s32 %v1095, %v1099
    %v1104 = vadd.s32 %v1096, %v1100
    %v1105 = vadd.s32 %v1097, %v1101
    %v1106 = vadd.s32 %v1098, %v1102
    %v1107 = vadd.s32 %v1103, %v1104
    %v1108 = vadd.s32 %v1105, %v1106
    %v1109 = vadd.s32 %v1107, %v1108
    %v1110 = vand.u32 %v1109, 65535
    %v1111 = vshrl.u32 %v1109, 16
    %v1112 = vcvt.s32.f32 %v1110
    %v1113 = vcvt.s32.f32 %v1111
    %1114 = vadd.xlane.f32.xlu0 %v1112
    %v1115 = vpop.xlane.xlu0 %1114
    %1116 = vadd.xlane.f32.xlu0 %v1113
    %v1117 = vpop.xlane.xlu0 %1116
    %v1118 = vcvt.f32.s32 %v1115
    %v1119 = vcvt.f32.s32 %v1117
    %v1120 = vshll.u32 %v1119, 16
    %v1121 = vadd.s32 %v1120, %v1118
    %vm1122 = vcmp.ge.s32.totalorder %v1121, 256
    %v1123 = vsel %vm1122, %v1086, %v1085
    %v1124 = vor.u32 %v1123, 8
    %vm1125 = vcmp.ge.s32.totalorder %v53, %v1124
    %vm1126 = vcmp.ge.s32.totalorder %v54, %v1124
    %vm1127 = vcmp.ge.s32.totalorder %v55, %v1124
    %vm1128 = vcmp.ge.s32.totalorder %v56, %v1124
    %vm1129 = vcmp.ge.s32.totalorder %v57, %v1124
    %vm1130 = vcmp.ge.s32.totalorder %v58, %v1124
    %vm1131 = vcmp.ge.s32.totalorder %v59, %v1124
    %vm1132 = vcmp.ge.s32.totalorder %v60, %v1124
    %v1133 = vsel %vm1125, 1, 0
    %v1134 = vsel %vm1126, 1, 0
    %v1135 = vsel %vm1127, 1, 0
    %v1136 = vsel %vm1128, 1, 0
    %v1137 = vsel %vm1129, 1, 0
    %v1138 = vsel %vm1130, 1, 0
    %v1139 = vsel %vm1131, 1, 0
    %v1140 = vsel %vm1132, 1, 0
    %v1141 = vadd.s32 %v1133, %v1137
    %v1142 = vadd.s32 %v1134, %v1138
    %v1143 = vadd.s32 %v1135, %v1139
    %v1144 = vadd.s32 %v1136, %v1140
    %v1145 = vadd.s32 %v1141, %v1142
    %v1146 = vadd.s32 %v1143, %v1144
    %v1147 = vadd.s32 %v1145, %v1146
    %v1148 = vand.u32 %v1147, 65535
    %v1149 = vshrl.u32 %v1147, 16
    %v1150 = vcvt.s32.f32 %v1148
    %v1151 = vcvt.s32.f32 %v1149
    %1152 = vadd.xlane.f32.xlu0 %v1150
    %v1153 = vpop.xlane.xlu0 %1152
    %1154 = vadd.xlane.f32.xlu0 %v1151
    %v1155 = vpop.xlane.xlu0 %1154
    %v1156 = vcvt.f32.s32 %v1153
    %v1157 = vcvt.f32.s32 %v1155
    %v1158 = vshll.u32 %v1157, 16
    %v1159 = vadd.s32 %v1158, %v1156
    %vm1160 = vcmp.ge.s32.totalorder %v1159, 256
    %v1161 = vsel %vm1160, %v1124, %v1123
    %v1162 = vor.u32 %v1161, 4
    %vm1163 = vcmp.ge.s32.totalorder %v53, %v1162
    %vm1164 = vcmp.ge.s32.totalorder %v54, %v1162
    %vm1165 = vcmp.ge.s32.totalorder %v55, %v1162
    %vm1166 = vcmp.ge.s32.totalorder %v56, %v1162
    %vm1167 = vcmp.ge.s32.totalorder %v57, %v1162
    %vm1168 = vcmp.ge.s32.totalorder %v58, %v1162
    %vm1169 = vcmp.ge.s32.totalorder %v59, %v1162
    %vm1170 = vcmp.ge.s32.totalorder %v60, %v1162
    %v1171 = vsel %vm1163, 1, 0
    %v1172 = vsel %vm1164, 1, 0
    %v1173 = vsel %vm1165, 1, 0
    %v1174 = vsel %vm1166, 1, 0
    %v1175 = vsel %vm1167, 1, 0
    %v1176 = vsel %vm1168, 1, 0
    %v1177 = vsel %vm1169, 1, 0
    %v1178 = vsel %vm1170, 1, 0
    %v1179 = vadd.s32 %v1171, %v1175
    %v1180 = vadd.s32 %v1172, %v1176
    %v1181 = vadd.s32 %v1173, %v1177
    %v1182 = vadd.s32 %v1174, %v1178
    %v1183 = vadd.s32 %v1179, %v1180
    %v1184 = vadd.s32 %v1181, %v1182
    %v1185 = vadd.s32 %v1183, %v1184
    %v1186 = vand.u32 %v1185, 65535
    %v1187 = vshrl.u32 %v1185, 16
    %v1188 = vcvt.s32.f32 %v1186
    %v1189 = vcvt.s32.f32 %v1187
    %1190 = vadd.xlane.f32.xlu0 %v1188
    %v1191 = vpop.xlane.xlu0 %1190
    %1192 = vadd.xlane.f32.xlu0 %v1189
    %v1193 = vpop.xlane.xlu0 %1192
    %v1194 = vcvt.f32.s32 %v1191
    %v1195 = vcvt.f32.s32 %v1193
    %v1196 = vshll.u32 %v1195, 16
    %v1197 = vadd.s32 %v1196, %v1194
    %vm1198 = vcmp.ge.s32.totalorder %v1197, 256
    %v1199 = vsel %vm1198, %v1162, %v1161
    %v1200 = vor.u32 %v1199, 2
    %vm1201 = vcmp.ge.s32.totalorder %v53, %v1200
    %vm1202 = vcmp.ge.s32.totalorder %v54, %v1200
    %vm1203 = vcmp.ge.s32.totalorder %v55, %v1200
    %vm1204 = vcmp.ge.s32.totalorder %v56, %v1200
    %vm1205 = vcmp.ge.s32.totalorder %v57, %v1200
    %vm1206 = vcmp.ge.s32.totalorder %v58, %v1200
    %vm1207 = vcmp.ge.s32.totalorder %v59, %v1200
    %vm1208 = vcmp.ge.s32.totalorder %v60, %v1200
    %v1209 = vsel %vm1201, 1, 0
    %v1210 = vsel %vm1202, 1, 0
    %v1211 = vsel %vm1203, 1, 0
    %v1212 = vsel %vm1204, 1, 0
    %v1213 = vsel %vm1205, 1, 0
    %v1214 = vsel %vm1206, 1, 0
    %v1215 = vsel %vm1207, 1, 0
    %v1216 = vsel %vm1208, 1, 0
    %v1217 = vadd.s32 %v1209, %v1213
    %v1218 = vadd.s32 %v1210, %v1214
    %v1219 = vadd.s32 %v1211, %v1215
    %v1220 = vadd.s32 %v1212, %v1216
    %v1221 = vadd.s32 %v1217, %v1218
    %v1222 = vadd.s32 %v1219, %v1220
    %v1223 = vadd.s32 %v1221, %v1222
    %v1224 = vand.u32 %v1223, 65535
    %v1225 = vshrl.u32 %v1223, 16
    %v1226 = vcvt.s32.f32 %v1224
    %v1227 = vcvt.s32.f32 %v1225
    %1228 = vadd.xlane.f32.xlu0 %v1226
    %v1229 = vpop.xlane.xlu0 %1228
    %1230 = vadd.xlane.f32.xlu0 %v1227
    %v1231 = vpop.xlane.xlu0 %1230
    %v1232 = vcvt.f32.s32 %v1229
    %v1233 = vcvt.f32.s32 %v1231
    %v1234 = vshll.u32 %v1233, 16
    %v1235 = vadd.s32 %v1234, %v1232
    %vm1236 = vcmp.ge.s32.totalorder %v1235, 256
    %v1237 = vsel %vm1236, %v1200, %v1199
    %v1238 = vor.u32 %v1237, 1
    %vm1239 = vcmp.ge.s32.totalorder %v53, %v1238
    %vm1240 = vcmp.ge.s32.totalorder %v54, %v1238
    %vm1241 = vcmp.ge.s32.totalorder %v55, %v1238
    %vm1242 = vcmp.ge.s32.totalorder %v56, %v1238
    %vm1243 = vcmp.ge.s32.totalorder %v57, %v1238
    %vm1244 = vcmp.ge.s32.totalorder %v58, %v1238
    %vm1245 = vcmp.ge.s32.totalorder %v59, %v1238
    %vm1246 = vcmp.ge.s32.totalorder %v60, %v1238
    %v1247 = vsel %vm1239, 1, 0
    %v1248 = vsel %vm1240, 1, 0
    %v1249 = vsel %vm1241, 1, 0
    %v1250 = vsel %vm1242, 1, 0
    %v1251 = vsel %vm1243, 1, 0
    %v1252 = vsel %vm1244, 1, 0
    %v1253 = vsel %vm1245, 1, 0
    %v1254 = vsel %vm1246, 1, 0
    %v1255 = vadd.s32 %v1247, %v1251
    %v1256 = vadd.s32 %v1248, %v1252
    %v1257 = vadd.s32 %v1249, %v1253
    %v1258 = vadd.s32 %v1250, %v1254
    %v1259 = vadd.s32 %v1255, %v1256
    %v1260 = vadd.s32 %v1257, %v1258
    %v1261 = vadd.s32 %v1259, %v1260
    %v1262 = vand.u32 %v1261, 65535
    %v1263 = vshrl.u32 %v1261, 16
    %v1264 = vcvt.s32.f32 %v1262
    %v1265 = vcvt.s32.f32 %v1263
    %1266 = vadd.xlane.f32.xlu0 %v1264
    %v1267 = vpop.xlane.xlu0 %1266
    %1268 = vadd.xlane.f32.xlu0 %v1265
    %v1269 = vpop.xlane.xlu0 %1268
    %v1270 = vcvt.f32.s32 %v1267
    %v1271 = vcvt.f32.s32 %v1269
    %v1272 = vshll.u32 %v1271, 16
    %v1273 = vadd.s32 %v1272, %v1270
    %vm1274 = vcmp.ge.s32.totalorder %v1273, 256
    %v1275 = vsel %vm1274, %v1238, %v1237
    %vm1276 = vcmp.ge.s32.totalorder %v53, %v1275
    %vm1277 = vcmp.ge.s32.totalorder %v54, %v1275
    %vm1278 = vcmp.ge.s32.totalorder %v55, %v1275
    %vm1279 = vcmp.ge.s32.totalorder %v56, %v1275
    %vm1280 = vcmp.ge.s32.totalorder %v57, %v1275
    %vm1281 = vcmp.ge.s32.totalorder %v58, %v1275
    %vm1282 = vcmp.ge.s32.totalorder %v59, %v1275
    %vm1283 = vcmp.ge.s32.totalorder %v60, %v1275
    %v1284 = vsel %vm1276, %v21, inf
    %v1285 = vsel %vm1277, %v22, inf
    %v1286 = vsel %vm1278, %v23, inf
    %v1287 = vsel %vm1279, %v24, inf
    %v1288 = vsel %vm1280, %v25, inf
    %v1289 = vsel %vm1281, %v26, inf
    %v1290 = vsel %vm1282, %v27, inf
    %v1291 = vsel %vm1283, %v28, inf
    %v1292 = vmin.f32 %v1284, %v1288
    %v1293 = vmin.f32 %v1285, %v1289
    %v1294 = vmin.f32 %v1286, %v1290
    %v1295 = vmin.f32 %v1287, %v1291
    %v1296 = vmin.f32 %v1292, %v1293
    %v1297 = vmin.f32 %v1294, %v1295
    %v1298 = vmin.f32 %v1296, %v1297
    %1299 = vmin.xlane.f32.xlu0 %v1298
    %v1300 = vpop.xlane.xlu0 %1299
    %v1301 = vsel %vm1276, 1, 0
    %v1302 = vsel %vm1277, 1, 0
    %v1303 = vsel %vm1278, 1, 0
    %v1304 = vsel %vm1279, 1, 0
    %v1305 = vsel %vm1280, 1, 0
    %v1306 = vsel %vm1281, 1, 0
    %v1307 = vsel %vm1282, 1, 0
    %v1308 = vsel %vm1283, 1, 0
    %v1309 = vadd.s32 %v1301, %v1305
    %v1310 = vadd.s32 %v1302, %v1306
    %v1311 = vadd.s32 %v1303, %v1307
    %v1312 = vadd.s32 %v1304, %v1308
    %v1313 = vadd.s32 %v1309, %v1310
    %v1314 = vadd.s32 %v1311, %v1312
    %v1315 = vadd.s32 %v1313, %v1314
    %v1316 = vand.u32 %v1315, 65535
    %v1317 = vshrl.u32 %v1315, 16
    %v1318 = vcvt.s32.f32 %v1316
    %v1319 = vcvt.s32.f32 %v1317
    %1320 = vadd.xlane.f32.xlu0 %v1318
    %v1321 = vpop.xlane.xlu0 %1320
    %1322 = vadd.xlane.f32.xlu0 %v1319
    %v1323 = vpop.xlane.xlu0 %1322
    %v1324 = vcvt.f32.s32 %v1321
    %v1325 = vcvt.f32.s32 %v1323
    %v1326 = vshll.u32 %v1325, 16
    %v1327 = vadd.s32 %v1326, %v1324
    %vm1328 = vcmp.lt.s32.totalorder %v53, %v1275
    %vm1329 = vcmp.lt.s32.totalorder %v54, %v1275
    %vm1330 = vcmp.lt.s32.totalorder %v55, %v1275
    %vm1331 = vcmp.lt.s32.totalorder %v56, %v1275
    %vm1332 = vcmp.lt.s32.totalorder %v57, %v1275
    %vm1333 = vcmp.lt.s32.totalorder %v58, %v1275
    %vm1334 = vcmp.lt.s32.totalorder %v59, %v1275
    %vm1335 = vcmp.lt.s32.totalorder %v60, %v1275
    %v1336 = vsel %vm1328, %v21, -inf
    %v1337 = vsel %vm1329, %v22, -inf
    %v1338 = vsel %vm1330, %v23, -inf
    %v1339 = vsel %vm1331, %v24, -inf
    %v1340 = vsel %vm1332, %v25, -inf
    %v1341 = vsel %vm1333, %v26, -inf
    %v1342 = vsel %vm1334, %v27, -inf
    %v1343 = vsel %vm1335, %v28, -inf
    %v1344 = vmax.f32 %v1336, %v1340
    %v1345 = vmax.f32 %v1337, %v1341
    %v1346 = vmax.f32 %v1338, %v1342
    %v1347 = vmax.f32 %v1339, %v1343
    %v1348 = vmax.f32 %v1344, %v1345
    %v1349 = vmax.f32 %v1346, %v1347
    %v1350 = vmax.f32 %v1348, %v1349
    %1351 = vmax.xlane.f32.xlu0 %v1350
    %v1352 = vpop.xlane.xlu0 %1351
    %vm1353 = vcmp.ge.s32.totalorder %v1327, 257
    %v1354 = vsel %vm1353, %v1300, %v1352
    %v1355 = vadd.f32 %v1300, %v1354
    %v1356 = vmul.f32 %v1355, 0.5
    %v1357 = vsub.f32 %v21, %v1356
    %v1358 = vsub.f32 %v22, %v1356
    %v1359 = vsub.f32 %v23, %v1356
    %v1360 = vsub.f32 %v24, %v1356
    %v1361 = vsub.f32 %v25, %v1356
    %v1362 = vsub.f32 %v26, %v1356
    %v1363 = vsub.f32 %v27, %v1356
    %v1364 = vsub.f32 %v28, %v1356
    %v1365 = vmul.f32 %v1357, 0.33333334
    %v1366 = vmul.f32 %v1358, 0.33333334
    %v1367 = vmul.f32 %v1359, 0.33333334
    %v1368 = vmul.f32 %v1360, 0.33333334
    %v1369 = vmul.f32 %v1361, 0.33333334
    %v1370 = vmul.f32 %v1362, 0.33333334
    %v1371 = vmul.f32 %v1363, 0.33333334
    %v1372 = vmul.f32 %v1364, 0.33333334
    %v1373 = vadd.f32 %v1365, 0.5
    %v1374 = vadd.f32 %v1366, 0.5
    %v1375 = vadd.f32 %v1367, 0.5
    %v1376 = vadd.f32 %v1368, 0.5
    %v1377 = vadd.f32 %v1369, 0.5
    %v1378 = vadd.f32 %v1370, 0.5
    %v1379 = vadd.f32 %v1371, 0.5
    %v1380 = vadd.f32 %v1372, 0.5
    %v1381 = vmax.f32 %v1373, 0.0
    %v1382 = vmax.f32 %v1374, 0.0
    %v1383 = vmax.f32 %v1375, 0.0
    %v1384 = vmax.f32 %v1376, 0.0
    %v1385 = vmax.f32 %v1377, 0.0
    %v1386 = vmax.f32 %v1378, 0.0
    %v1387 = vmax.f32 %v1379, 0.0
    %v1388 = vmax.f32 %v1380, 0.0
    %v1389 = vmin.f32 %v1381, 1.0
    %v1390 = vmin.f32 %v1382, 1.0
    %v1391 = vmin.f32 %v1383, 1.0
    %v1392 = vmin.f32 %v1384, 1.0
    %v1393 = vmin.f32 %v1385, 1.0
    %v1394 = vmin.f32 %v1386, 1.0
    %v1395 = vmin.f32 %v1387, 1.0
    %v1396 = vmin.f32 %v1388, 1.0
    %1397 = vst [vmem:[#allocation5] sm:$0xff] %v1389
    %1398 = vst [vmem:[#allocation5 + $0x8] sm:$0xff] %v1390
    %1399 = vst [vmem:[#allocation5 + $0x10] sm:$0xff] %v1391
    %1400 = vst [vmem:[#allocation5 + $0x18] sm:$0xff] %v1392
    %1401 = vst [vmem:[#allocation5 + $0x20] sm:$0xff] %v1393
    %1402 = vst [vmem:[#allocation5 + $0x28] sm:$0xff] %v1394
    %1403 = vst [vmem:[#allocation5 + $0x30] sm:$0xff] %v1395
    %1404 = vst [vmem:[#allocation5 + $0x38] sm:$0xff] %v1396
    // Predicated region
    $region10: #{tpu_custom_call.1} parent=1 // pred_check
      _
    $region11: #{tpu_custom_call.1} parent=1 // pred_check_branch
      %1406 = sbr.rel (0) target = $region13
    $region12: #{tpu_custom_call.1} parent=1 // pred_region
      %s1408 = ssub.s32 1024, 1024
      %1409 = vsyncadd [#allocation4], %s1408
      %s1411 = sshll.u32 [#allocation5], 4
      %s1412 = int_to_ptr.vmem [resolvable:$true] %s1411
      %1414 = dma.vmem_to_hbm [thread:$0]  %s1412, 1024, %s1, [#allocation4]
    $region13: #{tpu_custom_call.1} parent=1 // pred_fallthru
      _
    // Predicated region
    $region14: #{tpu_custom_call.1} parent=1 // pred_check
      _
    $region15: #{tpu_custom_call.1} parent=1 // pred_check_branch
      %1416 = sbr.rel (0) target = $region17
    $region16: #{tpu_custom_call.1} parent=1 // pred_region
      %1417 = dma.done [#allocation4], 1024
    $region17: #{tpu_custom_call.1} parent=1 // pred_fallthru
      _
    %1418 = vsyncpa [#allocation3], 1
    %1419 = vsyncpa [#allocation4], 1

</llo_original>
